<compile_context>
chip_gen: v5e
topology: v5e:2x2
jax: 0.10.0
libtpu: 0.0.40
codegen_flags: <defaults>
</compile_context>

<pallas_src>
import functools

import jax
import jax.numpy as jnp
import numpy as np
from jax import lax
from jax.experimental import pallas as pl
from jax.experimental.pallas import tpu as pltpu


# ----------------------------------------------------------------------------
# Pallas kernel: full FCM forward for one batch element, packed (H, W*C) layout.
# ----------------------------------------------------------------------------
def fcm_kernel(x_ref,                       # (1, H, W*dim)   packed input
               m1_ref, t1_ref,              # (3, W*dim, W*C1), (1, W*C1)
               m12_ref, t12_ref,            # (3, W*C1, W*C1), (1, W*C1)
               b123_ref, t123_ref,          # (W*C1, W*dim),   (1, W*dim)
               b2_ref, t2_ref,              # (W*dim, W*dim),  (1, W*dim)
               sproj_ref, bsp_ref,          # (W*dim, W*dim),  (1, W*dim)
               wdw_ref, bdw_ref,            # (9, W*dim),      (1, W*dim)
               out_ref,                     # (1, H, W*dim)
               *, H, W, dim):
    D = dim
    WD = W * D
    x = x_ref[0]                            # (H, WD) f32

    # Hoisted index vectors / masks (reused by every shift below).
    rows = lax.broadcasted_iota(jnp.int32, (H, 1), 0)
    lanes = lax.broadcasted_iota(jnp.int32, (1, WD), 1)
    row_ok_up = rows >= 1                   # valid when reading row h-1
    row_ok_dn = rows < (H - 1)              # valid when reading row h+1
    lane_ok_l = lanes >= D                  # valid when reading column w-1
    lane_ok_r = lanes < (W - 1) * D         # valid when reading column w+1

    def silu(v):
        return v * jax.nn.sigmoid(v)

    def shift_rows(v, dy):
        # Row r of result = v[r + dy], zeros outside [0, H)  (SAME zero pad).
        if dy == 0:
            return v
        r = pltpu.roll(v, shift=(-dy) % H, axis=0)
        return jnp.where(row_ok_up if dy < 0 else row_ok_dn, r, 0.0)

    def conv3x3_packed(v, m_ref):
        # SAME 3x3 conv as 3 banded-block matmuls (dx taps inside the matrix).
        acc = jnp.dot(v, m_ref[1], preferred_element_type=jnp.float32)
        acc = acc + jnp.dot(shift_rows(v, -1), m_ref[0],
                            preferred_element_type=jnp.float32)
        acc = acc + jnp.dot(shift_rows(v, 1), m_ref[2],
                            preferred_element_type=jnp.float32)
        return acc

    # ---- branch 1: Conv3x3 -> Conv3x3 -> Conv1x1 (BN scale folded into mats)
    h1 = silu(conv3x3_packed(x, m1_ref) + t1_ref[...])        # (H, W*C1)
    h12 = silu(conv3x3_packed(h1, m12_ref) + t12_ref[...])    # (H, W*C1)
    x3 = silu(jnp.dot(h12, b123_ref[...],
                      preferred_element_type=jnp.float32) + t123_ref[...])   # (H, WD)

    # ---- branch 2: Conv1x1 on the x2 channel split (x1-channel rows are zero)
    x4 = silu(jnp.dot(x, b2_ref[...],
                      preferred_element_type=jnp.float32) + t2_ref[...])     # (H, WD)

    # ---- spatial attention: block-diagonal projection; the matmul both sums
    #      over the channel lanes of each pixel and re-broadcasts the scalar.
    sp = jax.nn.sigmoid(jnp.dot(x4, sproj_ref[...],
                                preferred_element_type=jnp.float32)
                        + bsp_ref[...])                                      # (H, WD)

    # ---- channel attention: depthwise 3x3 (+bias) -> GAP -> sigmoid
    wdw_all = wdw_ref[...]                                   # (9, WD), loaded once
    x3_rows = {-1: shift_rows(x3, -1), 0: x3, 1: shift_rows(x3, 1)}
    dw = jnp.zeros((H, WD), jnp.float32)
    for ky in range(3):
        base = x3_rows[ky - 1]
        for kx in range(3):
            dx = kx - 1
            v = base
            if dx != 0:
                v = pltpu.roll(v, shift=(-dx * D) % WD, axis=1)
                v = jnp.where(lane_ok_l if dx < 0 else lane_ok_r, v, 0.0)
            k = ky * 3 + kx
            dw = dw + v * wdw_all[k:k + 1]                   # (1, WD) tap weight

    col = jnp.sum(dw, axis=0, keepdims=True)                 # (1, WD) sum over H
    sh = W // 2
    while sh >= 1:                                           # lane roll-tree:
        col = col + pltpu.roll(col, shift=sh * D, axis=1)    # sum over W, result
        sh //= 2                                             # already W-broadcast
    ch = jax.nn.sigmoid(col * (1.0 / (H * W)) + bdw_ref[...])                # (1, WD)

    # ---- fuse: out = spatial(x4) * x3 + channel(x3) * x4   (lane-dense store)
    out_ref[0] = sp * x3 + ch * x4


# ----------------------------------------------------------------------------
# Host-side weight packing: fold BN scale, build banded / block-diag matrices.
# ----------------------------------------------------------------------------
def pack_params(P, W, dim):
    C1 = dim - dim // 4
    C2 = dim // 4
    WD, WC1 = W * dim, W * C1

    def np32(a):
        return np.asarray(a, np.float32)

    def tile_lanes(v):                      # per-channel (c,) -> (1, W*c) packed
        v = np32(v).reshape(-1)
        return jnp.asarray(np.tile(v, W).reshape(1, -1))

    def banded(w_hwio, scale, cin_total, cin_off):
        # SAME 3x3 conv as 3 banded block matrices in (W, C)-packed layout.
        w = np32(w_hwio) * np32(scale).reshape(1, 1, 1, -1)   # fold BN scale
        _, _, Cin, Cout = w.shape
        M = np.zeros((3, W * cin_total, W * Cout), np.float32)
        for kyi in range(3):
            for kxi in range(3):
                blk = w[kyi, kxi]                             # (Cin, Cout)
                for wo in range(W):
                    wi = wo + kxi - 1
                    if 0 <= wi < W:
                        r0 = wi * cin_total + cin_off
                        M[kyi, r0:r0 + Cin, wo * Cout:(wo + 1) * Cout] = blk
        return jnp.asarray(M)

    def block_diag_1x1(w_io, scale, cin_total, cin_off, cout):
        # 1x1 conv (Cin -> cout) as a (W*cin_total, W*cout) block-diagonal mat.
        w = np32(w_io) * np32(scale).reshape(1, -1)           # fold BN scale
        Cin = w.shape[0]
        M = np.zeros((W * cin_total, W * cout), np.float32)
        for wo in range(W):
            r0 = wo * cin_total + cin_off
            M[r0:r0 + Cin, wo * cout:(wo + 1) * cout] = w
        return jnp.asarray(M)

    out = {}
    out['m1'] = banded(P['w1'], P['s1'], dim, 0)              # reads x1 lanes of x
    out['t1'] = tile_lanes(P['t1'])
    out['m12'] = banded(P['w12'], P['s12'], C1, 0)
    out['t12'] = tile_lanes(P['t12'])
    out['b123'] = block_diag_1x1(P['w123'], P['s123'], C1, 0, dim)
    out['t123'] = tile_lanes(P['t123'])
    out['b2'] = block_diag_1x1(P['w2'], P['s2'], dim, C1, dim)  # x2 lanes only
    out['t2'] = tile_lanes(P['t2'])

    # Spatial attention: per-pixel block whose every column is the folded 1x1
    # weight -> the matmul also broadcasts the scalar over the channel lanes.
    ws = np32(P['ws']).reshape(dim)                           # BN scale pre-folded
    S = np.zeros((WD, WD), np.float32)
    for wo in range(W):
        S[wo * dim:(wo + 1) * dim, wo * dim:(wo + 1) * dim] = ws[:, None]
    out['sproj'] = jnp.asarray(S)
    out['bsp'] = tile_lanes(np.full((dim,), float(P['bsp'][0, 0]), np.float32))

    wdw = np32(P['wdw'])                                      # (3, 3, dim)
    out['wdw'] = jnp.asarray(np.tile(wdw.reshape(9, dim), (1, W)))   # (9, WD)
    out['bdw'] = tile_lanes(P['bdw'])
    return out


# ----------------------------------------------------------------------------
# Wrapper: pack input to lane-dense (B, H, W*dim), build BlockSpecs, call Pallas.
# ----------------------------------------------------------------------------
def _full_spec(a):
    nd = a.ndim
    return pl.BlockSpec(a.shape, lambda b, _nd=nd: (0,) * _nd)


def fcm_forward(x_nhwc, P):
    B, H, W, dim = x_nhwc.shape
    assert W & (W - 1) == 0, "W must be a power of two for the GAP roll-tree"
    WD = W * dim
    packed = pack_params(P, W, dim)

    x_packed = x_nhwc.reshape(B, H, WD)     # free reshape, lane-dense rows

    weights = [packed['m1'], packed['t1'],
               packed['m12'], packed['t12'],
               packed['b123'], packed['t123'],
               packed['b2'], packed['t2'],
               packed['sproj'], packed['bsp'],
               packed['wdw'], packed['bdw']]

    in_specs = ([pl.BlockSpec((1, H, WD), lambda b: (b, 0, 0))]
                + [_full_spec(w) for w in weights])
    out_spec = pl.BlockSpec((1, H, WD), lambda b: (b, 0, 0))

    kernel = functools.partial(fcm_kernel, H=H, W=W, dim=dim)
    out = pl.pallas_call(
        kernel,
        out_shape=jax.ShapeDtypeStruct((B, H, WD), jnp.float32),
        grid_spec=pltpu.PrefetchScalarGridSpec(
            num_scalar_prefetch=0,
            grid=(B,),
            in_specs=in_specs,
            out_specs=out_spec),
        compiler_params=pltpu.CompilerParams(
            dimension_semantics=("parallel",)),
    )(x_packed, *weights)
    return out.reshape(B, H, W, dim)


# ----------------------------------------------------------------------------
# Deterministic parameter construction (shapes from the module's __init__).
# BatchNorm is folded (inference mode, running stats) into (scale, shift).
# ----------------------------------------------------------------------------
def make_params(key, dim):
    C1 = dim - dim // 4
    C2 = dim // 4
    keys = iter(jax.random.split(key, 32))
    nxt = lambda: next(keys)

    def w_init(shape, scale=0.25):
        return scale * jax.random.normal(nxt(), shape, jnp.float32)

    def bn_init(c):
        gamma = 1.0 + 0.1 * jax.random.normal(nxt(), (c,), jnp.float32)
        beta = 0.1 * jax.random.normal(nxt(), (c,), jnp.float32)
        mu = 0.1 * jax.random.normal(nxt(), (c,), jnp.float32)
        var = jnp.abs(jax.random.normal(nxt(), (c,), jnp.float32)) + 0.5
        scale = gamma / jnp.sqrt(var + 1e-5)
        shift = beta - mu * scale
        return scale.reshape(1, c), shift.reshape(1, c)

    P = {'C1': C1, 'C2': C2}
    # Conv(one, one, 3) / Conv(one, one, 3) / Conv(one, dim, 1) / Conv(two, dim, 1)
    P['w1'] = w_init((3, 3, C1, C1));  P['s1'], P['t1'] = bn_init(C1)
    P['w12'] = w_init((3, 3, C1, C1)); P['s12'], P['t12'] = bn_init(C1)
    P['w123_hwio'] = w_init((1, 1, C1, dim)); P['s123'], P['t123'] = bn_init(dim)
    P['w2_hwio'] = w_init((1, 1, C2, dim));   P['s2'], P['t2'] = bn_init(dim)
    # Spatial_aifengheguai: 1x1 conv dim->1 (with bias) + BN(1), folded
    ws = w_init((1, 1, dim, 1))
    bs = 0.1 * jax.random.normal(nxt(), (), jnp.float32)
    ss, ts = bn_init(1)
    P['ws_hwio'] = ws * ss[0, 0]
    P['bsp'] = (bs * ss[0, 0] + ts[0, 0]).reshape(1, 1)
    # Channel_aifengheguai: depthwise 3x3 (groups=dim, with bias)
    P['wdw_hwio'] = w_init((3, 3, 1, dim))
    P['bdw'] = (0.1 * jax.random.normal(nxt(), (dim,), jnp.float32)).reshape(1, dim)
    # matrix-form weights used by the packer
    P['w123'] = P['w123_hwio'][0, 0]
    P['w2'] = P['w2_hwio'][0, 0]
    P['ws'] = P['ws_hwio'][0, 0]          # (dim, 1)
    P['wdw'] = P['wdw_hwio'][:, :, 0, :]  # (3, 3, dim)
    return P


# ----------------------------------------------------------------------------
# Pure-JAX reference (NHWC) for numerical validation.
# ----------------------------------------------------------------------------
def fcm_ref(x, P):
    C1 = P['C1']
    D = x.shape[-1]
    x1, x2 = x[..., :C1], x[..., C1:]

    def conv(a, w, groups=1):
        return jax.lax.conv_general_dilated(
            a, w, (1, 1), 'SAME',
            dimension_numbers=('NHWC', 'HWIO', 'NHWC'),
            feature_group_count=groups)

    def cbs(a, w, s, t):
        y = conv(a, w) * s + t
        return y * jax.nn.sigmoid(y)

    h = cbs(x1, P['w1'], P['s1'], P['t1'])
    h = cbs(h, P['w12'], P['s12'], P['t12'])
    x3 = cbs(h, P['w123_hwio'], P['s123'], P['t123'])
    x4 = cbs(x2, P['w2_hwio'], P['s2'], P['t2'])
    sp = jax.nn.sigmoid(conv(x4, P['ws_hwio']) + P['bsp'])
    dwo = conv(x3, P['wdw_hwio'], groups=D) + P['bdw']
    ch = jax.nn.sigmoid(jnp.mean(dwo, axis=(1, 2), keepdims=True))
    return sp * x3 + ch * x4


if __name__ == "__main__":
    # PyTorch-equivalent input: NCHW (2, 8, 16, 16) -> NHWC (2, 16, 16, 8) here.
    dim, B, H, W = 8, 2, 16, 16
    key = jax.random.PRNGKey(0)
    kx, kp = jax.random.split(key)
    x = jax.random.normal(kx, (B, H, W, dim), jnp.float32)
    P = make_params(kp, dim)

    out = fcm_forward(x, P)
    out = jax.block_until_ready(out)
    assert out.shape == (B, H, W, dim)

    ref = fcm_ref(x, P)
    np.testing.assert_allclose(np.asarray(out), np.asarray(ref), rtol=2e-3, atol=2e-3)
    print("KERNEL_OK")
</pallas_src>

<mosaic_0001>
module attributes {stable_mosaic.version = 11 : i64} {
  func.func @fcm_kernel(%arg0: i32, %arg1: memref<1x16x128xf32, #tpu.memory_space<vmem>>, %arg2: memref<3x128x96xf32, #tpu.memory_space<vmem>>, %arg3: memref<1x96xf32, #tpu.memory_space<vmem>>, %arg4: memref<3x96x96xf32, #tpu.memory_space<vmem>>, %arg5: memref<1x96xf32, #tpu.memory_space<vmem>>, %arg6: memref<96x128xf32, #tpu.memory_space<vmem>>, %arg7: memref<1x128xf32, #tpu.memory_space<vmem>>, %arg8: memref<128x128xf32, #tpu.memory_space<vmem>>, %arg9: memref<1x128xf32, #tpu.memory_space<vmem>>, %arg10: memref<128x128xf32, #tpu.memory_space<vmem>>, %arg11: memref<1x128xf32, #tpu.memory_space<vmem>>, %arg12: memref<9x128xf32, #tpu.memory_space<vmem>>, %arg13: memref<1x128xf32, #tpu.memory_space<vmem>>, %arg14: memref<1x16x128xf32, #tpu.memory_space<vmem>>) attributes {dimension_semantics = [#tpu.dimension_semantics<parallel>], iteration_bounds = array<i64: 2>, scalar_prefetch = 0 : i64, scratch_operands = 0 : i64, tpu.core_type = #tpu.core_type<tc>, window_params = [{transform_indices = @transform_0, window_bounds = array<i64: 1, 16, 128>}, {pipeline_mode = #tpu.pipeline_mode<synchronous>, transform_indices = @transform_1, window_bounds = array<i64: 3, 128, 96>}, {pipeline_mode = #tpu.pipeline_mode<synchronous>, transform_indices = @transform_2, window_bounds = array<i64: 1, 96>}, {pipeline_mode = #tpu.pipeline_mode<synchronous>, transform_indices = @transform_3, window_bounds = array<i64: 3, 96, 96>}, {pipeline_mode = #tpu.pipeline_mode<synchronous>, transform_indices = @transform_4, window_bounds = array<i64: 1, 96>}, {pipeline_mode = #tpu.pipeline_mode<synchronous>, transform_indices = @transform_5, window_bounds = array<i64: 96, 128>}, {pipeline_mode = #tpu.pipeline_mode<synchronous>, transform_indices = @transform_6, window_bounds = array<i64: 1, 128>}, {pipeline_mode = #tpu.pipeline_mode<synchronous>, transform_indices = @transform_7, window_bounds = array<i64: 128, 128>}, {pipeline_mode = #tpu.pipeline_mode<synchronous>, transform_indices = @transform_8, window_bounds = array<i64: 1, 128>}, {pipeline_mode = #tpu.pipeline_mode<synchronous>, transform_indices = @transform_9, window_bounds = array<i64: 128, 128>}, {pipeline_mode = #tpu.pipeline_mode<synchronous>, transform_indices = @transform_10, window_bounds = array<i64: 1, 128>}, {pipeline_mode = #tpu.pipeline_mode<synchronous>, transform_indices = @transform_11, window_bounds = array<i64: 9, 128>}, {pipeline_mode = #tpu.pipeline_mode<synchronous>, transform_indices = @transform_12, window_bounds = array<i64: 1, 128>}, {transform_indices = @transform_13, window_bounds = array<i64: 1, 16, 128>}]} {
    %c0 = arith.constant 0 : index
    %c0_0 = arith.constant 0 : index
    %c0_1 = arith.constant 0 : index
    %0 = vector.load %arg1[%c0, %c0_0, %c0_1] : memref<1x16x128xf32, #tpu.memory_space<vmem>>, vector<1x16x128xf32>
    %1 = vector.shape_cast %0 : vector<1x16x128xf32> to vector<16x128xf32>
    %2 = tpu.iota {dimensions = array<i32: 0>} : vector<16x1xi32>
    %3 = tpu.iota {dimensions = array<i32: 1>} : vector<1x128xi32>
    %c1_i32 = arith.constant 1 : i32
    %4 = vector.broadcast %c1_i32 : i32 to vector<16x1xi32>
    %5 = arith.cmpi sge, %2, %4 : vector<16x1xi32>
    %c15_i32 = arith.constant 15 : i32
    %6 = vector.broadcast %c15_i32 : i32 to vector<16x1xi32>
    %7 = arith.cmpi slt, %2, %6 : vector<16x1xi32>
    %c8_i32 = arith.constant 8 : i32
    %8 = vector.broadcast %c8_i32 : i32 to vector<1x128xi32>
    %9 = arith.cmpi sge, %3, %8 : vector<1x128xi32>
    %c120_i32 = arith.constant 120 : i32
    %10 = vector.broadcast %c120_i32 : i32 to vector<1x128xi32>
    %11 = arith.cmpi slt, %3, %10 : vector<1x128xi32>
    %c1 = arith.constant 1 : index
    %c0_2 = arith.constant 0 : index
    %c0_3 = arith.constant 0 : index
    %12 = vector.load %arg2[%c1, %c0_2, %c0_3] : memref<3x128x96xf32, #tpu.memory_space<vmem>>, vector<1x128x96xf32>
    %13 = vector.shape_cast %12 : vector<1x128x96xf32> to vector<128x96xf32>
    %cst = arith.constant dense<0.000000e+00> : vector<16x96xf32>
    %14 = tpu.matmul %1, %13, %cst {dimension_numbers = #tpu.dot_dimension_numbers<[1], [0], [0], [1], [0, 0, 1, 1], [], []>} : vector<16x128xf32>, vector<128x96xf32>, vector<16x96xf32> -> vector<16x96xf32>
    %c1_i32_4 = arith.constant 1 : i32
    %15 = tpu.dynamic_rotate %1 by %c1_i32_4 dim 0 : vector<16x128xf32>, i32 -> vector<16x128xf32>
    %cst_5 = arith.constant 0.000000e+00 : f32
    %16 = vector.shape_cast %5 : vector<16x1xi1> to vector<16x1xi1>
    %17 = vector.broadcast %16 : vector<16x1xi1> to vector<16x128xi1>
    %18 = vector.broadcast %cst_5 : f32 to vector<16x128xf32>
    %19 = arith.select %17, %15, %18 : vector<16x128xi1>, vector<16x128xf32>
    %c0_6 = arith.constant 0 : index
    %c0_7 = arith.constant 0 : index
    %c0_8 = arith.constant 0 : index
    %20 = vector.load %arg2[%c0_6, %c0_7, %c0_8] : memref<3x128x96xf32, #tpu.memory_space<vmem>>, vector<1x128x96xf32>
    %21 = vector.shape_cast %20 : vector<1x128x96xf32> to vector<128x96xf32>
    %cst_9 = arith.constant dense<0.000000e+00> : vector<16x96xf32>
    %22 = tpu.matmul %19, %21, %cst_9 {dimension_numbers = #tpu.dot_dimension_numbers<[1], [0], [0], [1], [0, 0, 1, 1], [], []>} : vector<16x128xf32>, vector<128x96xf32>, vector<16x96xf32> -> vector<16x96xf32>
    %23 = arith.addf %14, %22 : vector<16x96xf32>
    %c15_i32_10 = arith.constant 15 : i32
    %24 = tpu.dynamic_rotate %1 by %c15_i32_10 dim 0 : vector<16x128xf32>, i32 -> vector<16x128xf32>
    %cst_11 = arith.constant 0.000000e+00 : f32
    %25 = vector.shape_cast %7 : vector<16x1xi1> to vector<16x1xi1>
    %26 = vector.broadcast %25 : vector<16x1xi1> to vector<16x128xi1>
    %27 = vector.broadcast %cst_11 : f32 to vector<16x128xf32>
    %28 = arith.select %26, %24, %27 : vector<16x128xi1>, vector<16x128xf32>
    %c2 = arith.constant 2 : index
    %c0_12 = arith.constant 0 : index
    %c0_13 = arith.constant 0 : index
    %29 = vector.load %arg2[%c2, %c0_12, %c0_13] : memref<3x128x96xf32, #tpu.memory_space<vmem>>, vector<1x128x96xf32>
    %30 = vector.shape_cast %29 : vector<1x128x96xf32> to vector<128x96xf32>
    %cst_14 = arith.constant dense<0.000000e+00> : vector<16x96xf32>
    %31 = tpu.matmul %28, %30, %cst_14 {dimension_numbers = #tpu.dot_dimension_numbers<[1], [0], [0], [1], [0, 0, 1, 1], [], []>} : vector<16x128xf32>, vector<128x96xf32>, vector<16x96xf32> -> vector<16x96xf32>
    %32 = arith.addf %23, %31 : vector<16x96xf32>
    %c0_15 = arith.constant 0 : index
    %c0_16 = arith.constant 0 : index
    %33 = vector.load %arg3[%c0_15, %c0_16] : memref<1x96xf32, #tpu.memory_space<vmem>>, vector<1x96xf32>
    %34 = vector.broadcast %33 : vector<1x96xf32> to vector<16x96xf32>
    %35 = arith.addf %32, %34 : vector<16x96xf32>
    %36 = arith.negf %35 : vector<16x96xf32>
    %37 = math.exp %36 : vector<16x96xf32>
    %cst_17 = arith.constant 1.000000e+00 : f32
    %38 = vector.broadcast %cst_17 : f32 to vector<16x96xf32>
    %39 = arith.addf %38, %37 : vector<16x96xf32>
    %40 = arith.divf %38, %39 : vector<16x96xf32>
    %41 = arith.mulf %35, %40 : vector<16x96xf32>
    %c1_18 = arith.constant 1 : index
    %c0_19 = arith.constant 0 : index
    %c0_20 = arith.constant 0 : index
    %42 = vector.load %arg4[%c1_18, %c0_19, %c0_20] : memref<3x96x96xf32, #tpu.memory_space<vmem>>, vector<1x96x96xf32>
    %43 = vector.shape_cast %42 : vector<1x96x96xf32> to vector<96x96xf32>
    %cst_21 = arith.constant dense<0.000000e+00> : vector<16x96xf32>
    %44 = tpu.matmul %41, %43, %cst_21 {dimension_numbers = #tpu.dot_dimension_numbers<[1], [0], [0], [1], [0, 0, 1, 1], [], []>} : vector<16x96xf32>, vector<96x96xf32>, vector<16x96xf32> -> vector<16x96xf32>
    %c1_i32_22 = arith.constant 1 : i32
    %45 = tpu.dynamic_rotate %41 by %c1_i32_22 dim 0 : vector<16x96xf32>, i32 -> vector<16x96xf32>
    %cst_23 = arith.constant 0.000000e+00 : f32
    %46 = vector.shape_cast %5 : vector<16x1xi1> to vector<16x1xi1>
    %47 = vector.broadcast %46 : vector<16x1xi1> to vector<16x96xi1>
    %48 = vector.broadcast %cst_23 : f32 to vector<16x96xf32>
    %49 = arith.select %47, %45, %48 : vector<16x96xi1>, vector<16x96xf32>
    %c0_24 = arith.constant 0 : index
    %c0_25 = arith.constant 0 : index
    %c0_26 = arith.constant 0 : index
    %50 = vector.load %arg4[%c0_24, %c0_25, %c0_26] : memref<3x96x96xf32, #tpu.memory_space<vmem>>, vector<1x96x96xf32>
    %51 = vector.shape_cast %50 : vector<1x96x96xf32> to vector<96x96xf32>
    %cst_27 = arith.constant dense<0.000000e+00> : vector<16x96xf32>
    %52 = tpu.matmul %49, %51, %cst_27 {dimension_numbers = #tpu.dot_dimension_numbers<[1], [0], [0], [1], [0, 0, 1, 1], [], []>} : vector<16x96xf32>, vector<96x96xf32>, vector<16x96xf32> -> vector<16x96xf32>
    %53 = arith.addf %44, %52 : vector<16x96xf32>
    %c15_i32_28 = arith.constant 15 : i32
    %54 = tpu.dynamic_rotate %41 by %c15_i32_28 dim 0 : vector<16x96xf32>, i32 -> vector<16x96xf32>
    %cst_29 = arith.constant 0.000000e+00 : f32
    %55 = vector.shape_cast %7 : vector<16x1xi1> to vector<16x1xi1>
    %56 = vector.broadcast %55 : vector<16x1xi1> to vector<16x96xi1>
    %57 = vector.broadcast %cst_29 : f32 to vector<16x96xf32>
    %58 = arith.select %56, %54, %57 : vector<16x96xi1>, vector<16x96xf32>
    %c2_30 = arith.constant 2 : index
    %c0_31 = arith.constant 0 : index
    %c0_32 = arith.constant 0 : index
    %59 = vector.load %arg4[%c2_30, %c0_31, %c0_32] : memref<3x96x96xf32, #tpu.memory_space<vmem>>, vector<1x96x96xf32>
    %60 = vector.shape_cast %59 : vector<1x96x96xf32> to vector<96x96xf32>
    %cst_33 = arith.constant dense<0.000000e+00> : vector<16x96xf32>
    %61 = tpu.matmul %58, %60, %cst_33 {dimension_numbers = #tpu.dot_dimension_numbers<[1], [0], [0], [1], [0, 0, 1, 1], [], []>} : vector<16x96xf32>, vector<96x96xf32>, vector<16x96xf32> -> vector<16x96xf32>
    %62 = arith.addf %53, %61 : vector<16x96xf32>
    %c0_34 = arith.constant 0 : index
    %c0_35 = arith.constant 0 : index
    %63 = vector.load %arg5[%c0_34, %c0_35] : memref<1x96xf32, #tpu.memory_space<vmem>>, vector<1x96xf32>
    %64 = vector.broadcast %63 : vector<1x96xf32> to vector<16x96xf32>
    %65 = arith.addf %62, %64 : vector<16x96xf32>
    %66 = arith.negf %65 : vector<16x96xf32>
    %67 = math.exp %66 : vector<16x96xf32>
    %cst_36 = arith.constant 1.000000e+00 : f32
    %68 = vector.broadcast %cst_36 : f32 to vector<16x96xf32>
    %69 = arith.addf %68, %67 : vector<16x96xf32>
    %70 = arith.divf %68, %69 : vector<16x96xf32>
    %71 = arith.mulf %65, %70 : vector<16x96xf32>
    %c0_37 = arith.constant 0 : index
    %c0_38 = arith.constant 0 : index
    %72 = vector.load %arg6[%c0_37, %c0_38] : memref<96x128xf32, #tpu.memory_space<vmem>>, vector<96x128xf32>
    %cst_39 = arith.constant dense<0.000000e+00> : vector<16x128xf32>
    %73 = tpu.matmul %71, %72, %cst_39 {dimension_numbers = #tpu.dot_dimension_numbers<[1], [0], [0], [1], [0, 0, 1, 1], [], []>} : vector<16x96xf32>, vector<96x128xf32>, vector<16x128xf32> -> vector<16x128xf32>
    %c0_40 = arith.constant 0 : index
    %c0_41 = arith.constant 0 : index
    %74 = vector.load %arg7[%c0_40, %c0_41] : memref<1x128xf32, #tpu.memory_space<vmem>>, vector<1x128xf32>
    %75 = vector.broadcast %74 : vector<1x128xf32> to vector<16x128xf32>
    %76 = arith.addf %73, %75 : vector<16x128xf32>
    %77 = arith.negf %76 : vector<16x128xf32>
    %78 = math.exp %77 : vector<16x128xf32>
    %cst_42 = arith.constant 1.000000e+00 : f32
    %79 = vector.broadcast %cst_42 : f32 to vector<16x128xf32>
    %80 = arith.addf %79, %78 : vector<16x128xf32>
    %81 = arith.divf %79, %80 : vector<16x128xf32>
    %82 = arith.mulf %76, %81 : vector<16x128xf32>
    %c0_43 = arith.constant 0 : index
    %c0_44 = arith.constant 0 : index
    %83 = vector.load %arg8[%c0_43, %c0_44] : memref<128x128xf32, #tpu.memory_space<vmem>>, vector<128x128xf32>
    %cst_45 = arith.constant dense<0.000000e+00> : vector<16x128xf32>
    %84 = tpu.matmul %1, %83, %cst_45 {dimension_numbers = #tpu.dot_dimension_numbers<[1], [0], [0], [1], [0, 0, 1, 1], [], []>} : vector<16x128xf32>, vector<128x128xf32>, vector<16x128xf32> -> vector<16x128xf32>
    %c0_46 = arith.constant 0 : index
    %c0_47 = arith.constant 0 : index
    %85 = vector.load %arg9[%c0_46, %c0_47] : memref<1x128xf32, #tpu.memory_space<vmem>>, vector<1x128xf32>
    %86 = vector.broadcast %85 : vector<1x128xf32> to vector<16x128xf32>
    %87 = arith.addf %84, %86 : vector<16x128xf32>
    %88 = arith.negf %87 : vector<16x128xf32>
    %89 = math.exp %88 : vector<16x128xf32>
    %cst_48 = arith.constant 1.000000e+00 : f32
    %90 = vector.broadcast %cst_48 : f32 to vector<16x128xf32>
    %91 = arith.addf %90, %89 : vector<16x128xf32>
    %92 = arith.divf %90, %91 : vector<16x128xf32>
    %93 = arith.mulf %87, %92 : vector<16x128xf32>
    %c0_49 = arith.constant 0 : index
    %c0_50 = arith.constant 0 : index
    %94 = vector.load %arg10[%c0_49, %c0_50] : memref<128x128xf32, #tpu.memory_space<vmem>>, vector<128x128xf32>
    %cst_51 = arith.constant dense<0.000000e+00> : vector<16x128xf32>
    %95 = tpu.matmul %93, %94, %cst_51 {dimension_numbers = #tpu.dot_dimension_numbers<[1], [0], [0], [1], [0, 0, 1, 1], [], []>} : vector<16x128xf32>, vector<128x128xf32>, vector<16x128xf32> -> vector<16x128xf32>
    %c0_52 = arith.constant 0 : index
    %c0_53 = arith.constant 0 : index
    %96 = vector.load %arg11[%c0_52, %c0_53] : memref<1x128xf32, #tpu.memory_space<vmem>>, vector<1x128xf32>
    %97 = vector.broadcast %96 : vector<1x128xf32> to vector<16x128xf32>
    %98 = arith.addf %95, %97 : vector<16x128xf32>
    %99 = arith.negf %98 : vector<16x128xf32>
    %100 = math.exp %99 : vector<16x128xf32>
    %cst_54 = arith.constant 1.000000e+00 : f32
    %101 = vector.broadcast %cst_54 : f32 to vector<16x128xf32>
    %102 = arith.addf %101, %100 : vector<16x128xf32>
    %103 = arith.divf %101, %102 : vector<16x128xf32>
    %c0_55 = arith.constant 0 : index
    %c0_56 = arith.constant 0 : index
    %104 = vector.load %arg12[%c0_55, %c0_56] : memref<9x128xf32, #tpu.memory_space<vmem>>, vector<9x128xf32>
    %c1_i32_57 = arith.constant 1 : i32
    %105 = tpu.dynamic_rotate %82 by %c1_i32_57 dim 0 : vector<16x128xf32>, i32 -> vector<16x128xf32>
    %cst_58 = arith.constant 0.000000e+00 : f32
    %106 = vector.shape_cast %5 : vector<16x1xi1> to vector<16x1xi1>
    %107 = vector.broadcast %106 : vector<16x1xi1> to vector<16x128xi1>
    %108 = vector.broadcast %cst_58 : f32 to vector<16x128xf32>
    %109 = arith.select %107, %105, %108 : vector<16x128xi1>, vector<16x128xf32>
    %c15_i32_59 = arith.constant 15 : i32
    %110 = tpu.dynamic_rotate %82 by %c15_i32_59 dim 0 : vector<16x128xf32>, i32 -> vector<16x128xf32>
    %cst_60 = arith.constant 0.000000e+00 : f32
    %111 = vector.shape_cast %7 : vector<16x1xi1> to vector<16x1xi1>
    %112 = vector.broadcast %111 : vector<16x1xi1> to vector<16x128xi1>
    %113 = vector.broadcast %cst_60 : f32 to vector<16x128xf32>
    %114 = arith.select %112, %110, %113 : vector<16x128xi1>, vector<16x128xf32>
    %cst_61 = arith.constant 0.000000e+00 : f32
    %115 = vector.broadcast %cst_61 : f32 to vector<16x128xf32>
    %c8_i32_62 = arith.constant 8 : i32
    %116 = tpu.dynamic_rotate %109 by %c8_i32_62 dim 1 : vector<16x128xf32>, i32 -> vector<16x128xf32>
    %cst_63 = arith.constant 0.000000e+00 : f32
    %117 = vector.shape_cast %9 : vector<1x128xi1> to vector<1x128xi1>
    %118 = vector.broadcast %117 : vector<1x128xi1> to vector<16x128xi1>
    %119 = vector.broadcast %cst_63 : f32 to vector<16x128xf32>
    %120 = arith.select %118, %116, %119 : vector<16x128xi1>, vector<16x128xf32>
    %121 = vector.extract_strided_slice %104 {offsets = [0, 0], sizes = [1, 128], strides = [1, 1]} : vector<9x128xf32> to vector<1x128xf32>
    %122 = vector.broadcast %121 : vector<1x128xf32> to vector<16x128xf32>
    %123 = arith.mulf %120, %122 : vector<16x128xf32>
    %124 = arith.addf %115, %123 : vector<16x128xf32>
    %125 = vector.extract_strided_slice %104 {offsets = [1, 0], sizes = [1, 128], strides = [1, 1]} : vector<9x128xf32> to vector<1x128xf32>
    %126 = vector.broadcast %125 : vector<1x128xf32> to vector<16x128xf32>
    %127 = arith.mulf %109, %126 : vector<16x128xf32>
    %128 = arith.addf %124, %127 : vector<16x128xf32>
    %c120_i32_64 = arith.constant 120 : i32
    %129 = tpu.dynamic_rotate %109 by %c120_i32_64 dim 1 : vector<16x128xf32>, i32 -> vector<16x128xf32>
    %cst_65 = arith.constant 0.000000e+00 : f32
    %130 = vector.shape_cast %11 : vector<1x128xi1> to vector<1x128xi1>
    %131 = vector.broadcast %130 : vector<1x128xi1> to vector<16x128xi1>
    %132 = vector.broadcast %cst_65 : f32 to vector<16x128xf32>
    %133 = arith.select %131, %129, %132 : vector<16x128xi1>, vector<16x128xf32>
    %134 = vector.extract_strided_slice %104 {offsets = [2, 0], sizes = [1, 128], strides = [1, 1]} : vector<9x128xf32> to vector<1x128xf32>
    %135 = vector.broadcast %134 : vector<1x128xf32> to vector<16x128xf32>
    %136 = arith.mulf %133, %135 : vector<16x128xf32>
    %137 = arith.addf %128, %136 : vector<16x128xf32>
    %c8_i32_66 = arith.constant 8 : i32
    %138 = tpu.dynamic_rotate %82 by %c8_i32_66 dim 1 : vector<16x128xf32>, i32 -> vector<16x128xf32>
    %cst_67 = arith.constant 0.000000e+00 : f32
    %139 = vector.shape_cast %9 : vector<1x128xi1> to vector<1x128xi1>
    %140 = vector.broadcast %139 : vector<1x128xi1> to vector<16x128xi1>
    %141 = vector.broadcast %cst_67 : f32 to vector<16x128xf32>
    %142 = arith.select %140, %138, %141 : vector<16x128xi1>, vector<16x128xf32>
    %143 = vector.extract_strided_slice %104 {offsets = [3, 0], sizes = [1, 128], strides = [1, 1]} : vector<9x128xf32> to vector<1x128xf32>
    %144 = vector.broadcast %143 : vector<1x128xf32> to vector<16x128xf32>
    %145 = arith.mulf %142, %144 : vector<16x128xf32>
    %146 = arith.addf %137, %145 : vector<16x128xf32>
    %147 = vector.extract_strided_slice %104 {offsets = [4, 0], sizes = [1, 128], strides = [1, 1]} : vector<9x128xf32> to vector<1x128xf32>
    %148 = vector.broadcast %147 : vector<1x128xf32> to vector<16x128xf32>
    %149 = arith.mulf %82, %148 : vector<16x128xf32>
    %150 = arith.addf %146, %149 : vector<16x128xf32>
    %c120_i32_68 = arith.constant 120 : i32
    %151 = tpu.dynamic_rotate %82 by %c120_i32_68 dim 1 : vector<16x128xf32>, i32 -> vector<16x128xf32>
    %cst_69 = arith.constant 0.000000e+00 : f32
    %152 = vector.shape_cast %11 : vector<1x128xi1> to vector<1x128xi1>
    %153 = vector.broadcast %152 : vector<1x128xi1> to vector<16x128xi1>
    %154 = vector.broadcast %cst_69 : f32 to vector<16x128xf32>
    %155 = arith.select %153, %151, %154 : vector<16x128xi1>, vector<16x128xf32>
    %156 = vector.extract_strided_slice %104 {offsets = [5, 0], sizes = [1, 128], strides = [1, 1]} : vector<9x128xf32> to vector<1x128xf32>
    %157 = vector.broadcast %156 : vector<1x128xf32> to vector<16x128xf32>
    %158 = arith.mulf %155, %157 : vector<16x128xf32>
    %159 = arith.addf %150, %158 : vector<16x128xf32>
    %c8_i32_70 = arith.constant 8 : i32
    %160 = tpu.dynamic_rotate %114 by %c8_i32_70 dim 1 : vector<16x128xf32>, i32 -> vector<16x128xf32>
    %cst_71 = arith.constant 0.000000e+00 : f32
    %161 = vector.shape_cast %9 : vector<1x128xi1> to vector<1x128xi1>
    %162 = vector.broadcast %161 : vector<1x128xi1> to vector<16x128xi1>
    %163 = vector.broadcast %cst_71 : f32 to vector<16x128xf32>
    %164 = arith.select %162, %160, %163 : vector<16x128xi1>, vector<16x128xf32>
    %165 = vector.extract_strided_slice %104 {offsets = [6, 0], sizes = [1, 128], strides = [1, 1]} : vector<9x128xf32> to vector<1x128xf32>
    %166 = vector.broadcast %165 : vector<1x128xf32> to vector<16x128xf32>
    %167 = arith.mulf %164, %166 : vector<16x128xf32>
    %168 = arith.addf %159, %167 : vector<16x128xf32>
    %169 = vector.extract_strided_slice %104 {offsets = [7, 0], sizes = [1, 128], strides = [1, 1]} : vector<9x128xf32> to vector<1x128xf32>
    %170 = vector.broadcast %169 : vector<1x128xf32> to vector<16x128xf32>
    %171 = arith.mulf %114, %170 : vector<16x128xf32>
    %172 = arith.addf %168, %171 : vector<16x128xf32>
    %c120_i32_72 = arith.constant 120 : i32
    %173 = tpu.dynamic_rotate %114 by %c120_i32_72 dim 1 : vector<16x128xf32>, i32 -> vector<16x128xf32>
    %cst_73 = arith.constant 0.000000e+00 : f32
    %174 = vector.shape_cast %11 : vector<1x128xi1> to vector<1x128xi1>
    %175 = vector.broadcast %174 : vector<1x128xi1> to vector<16x128xi1>
    %176 = vector.broadcast %cst_73 : f32 to vector<16x128xf32>
    %177 = arith.select %175, %173, %176 : vector<16x128xi1>, vector<16x128xf32>
    %178 = vector.extract_strided_slice %104 {offsets = [8, 0], sizes = [1, 128], strides = [1, 1]} : vector<9x128xf32> to vector<1x128xf32>
    %179 = vector.broadcast %178 : vector<1x128xf32> to vector<16x128xf32>
    %180 = arith.mulf %177, %179 : vector<16x128xf32>
    %181 = arith.addf %172, %180 : vector<16x128xf32>
    %cst_74 = arith.constant dense<0.000000e+00> : vector<128xf32>
    %182 = vector.multi_reduction <add>, %181, %cst_74 [0] : vector<16x128xf32> to vector<128xf32>
    %183 = vector.shape_cast %182 : vector<128xf32> to vector<1x128xf32>
    %c64_i32 = arith.constant 64 : i32
    %184 = tpu.dynamic_rotate %183 by %c64_i32 dim 1 : vector<1x128xf32>, i32 -> vector<1x128xf32>
    %185 = arith.addf %183, %184 : vector<1x128xf32>
    %c32_i32 = arith.constant 32 : i32
    %186 = tpu.dynamic_rotate %185 by %c32_i32 dim 1 : vector<1x128xf32>, i32 -> vector<1x128xf32>
    %187 = arith.addf %185, %186 : vector<1x128xf32>
    %c16_i32 = arith.constant 16 : i32
    %188 = tpu.dynamic_rotate %187 by %c16_i32 dim 1 : vector<1x128xf32>, i32 -> vector<1x128xf32>
    %189 = arith.addf %187, %188 : vector<1x128xf32>
    %c8_i32_75 = arith.constant 8 : i32
    %190 = tpu.dynamic_rotate %189 by %c8_i32_75 dim 1 : vector<1x128xf32>, i32 -> vector<1x128xf32>
    %191 = arith.addf %189, %190 : vector<1x128xf32>
    %cst_76 = arith.constant 3.906250e-03 : f32
    %192 = vector.broadcast %cst_76 : f32 to vector<1x128xf32>
    %193 = arith.mulf %191, %192 : vector<1x128xf32>
    %c0_77 = arith.constant 0 : index
    %c0_78 = arith.constant 0 : index
    %194 = vector.load %arg13[%c0_77, %c0_78] : memref<1x128xf32, #tpu.memory_space<vmem>>, vector<1x128xf32>
    %195 = arith.addf %193, %194 : vector<1x128xf32>
    %196 = arith.negf %195 : vector<1x128xf32>
    %197 = math.exp %196 : vector<1x128xf32>
    %cst_79 = arith.constant 1.000000e+00 : f32
    %198 = vector.broadcast %cst_79 : f32 to vector<1x128xf32>
    %199 = arith.addf %198, %197 : vector<1x128xf32>
    %200 = arith.divf %198, %199 : vector<1x128xf32>
    %201 = arith.mulf %103, %82 : vector<16x128xf32>
    %202 = vector.broadcast %200 : vector<1x128xf32> to vector<16x128xf32>
    %203 = arith.mulf %202, %93 : vector<16x128xf32>
    %204 = arith.addf %201, %203 : vector<16x128xf32>
    %c0_80 = arith.constant 0 : index
    %c0_81 = arith.constant 0 : index
    %c0_82 = arith.constant 0 : index
    %205 = vector.load %arg14[%c0_80, %c0_81, %c0_82] : memref<1x16x128xf32, #tpu.memory_space<vmem>>, vector<1x16x128xf32>
    %206 = vector.shape_cast %205 : vector<1x16x128xf32> to vector<16x128xf32>
    %207 = vector.shape_cast %204 : vector<16x128xf32> to vector<1x16x128xf32>
    tpu.vector_store %arg14[%c0_80, %c0_81, %c0_82], %207 {strides = array<i32>} : memref<1x16x128xf32, #tpu.memory_space<vmem>>, vector<1x16x128xf32>,
    return
  }
  func.func @transform_0(%arg0: i32) -> (i32, i32, i32) {
    %c0_i32 = arith.constant 0 : i32
    %c0_i32_0 = arith.constant 0 : i32
    %c0_i32_1 = arith.constant 0 : i32
    return %arg0, %c0_i32, %c0_i32_0 : i32, i32, i32
  }
  func.func @transform_1(%arg0: i32) -> (i32, i32, i32) {
    %c0_i32 = arith.constant 0 : i32
    %c0_i32_0 = arith.constant 0 : i32
    %c0_i32_1 = arith.constant 0 : i32
    %c0_i32_2 = arith.constant 0 : i32
    return %c0_i32, %c0_i32_0, %c0_i32_1 : i32, i32, i32
  }
  func.func @transform_2(%arg0: i32) -> (i32, i32) {
    %c0_i32 = arith.constant 0 : i32
    %c0_i32_0 = arith.constant 0 : i32
    %c0_i32_1 = arith.constant 0 : i32
    return %c0_i32, %c0_i32_0 : i32, i32
  }
  func.func @transform_3(%arg0: i32) -> (i32, i32, i32) {
    %c0_i32 = arith.constant 0 : i32
    %c0_i32_0 = arith.constant 0 : i32
    %c0_i32_1 = arith.constant 0 : i32
    %c0_i32_2 = arith.constant 0 : i32
    return %c0_i32, %c0_i32_0, %c0_i32_1 : i32, i32, i32
  }
  func.func @transform_4(%arg0: i32) -> (i32, i32) {
    %c0_i32 = arith.constant 0 : i32
    %c0_i32_0 = arith.constant 0 : i32
    %c0_i32_1 = arith.constant 0 : i32
    return %c0_i32, %c0_i32_0 : i32, i32
  }
  func.func @transform_5(%arg0: i32) -> (i32, i32) {
    %c0_i32 = arith.constant 0 : i32
    %c0_i32_0 = arith.constant 0 : i32
    %c0_i32_1 = arith.constant 0 : i32
    return %c0_i32, %c0_i32_0 : i32, i32
  }
  func.func @transform_6(%arg0: i32) -> (i32, i32) {
    %c0_i32 = arith.constant 0 : i32
    %c0_i32_0 = arith.constant 0 : i32
    %c0_i32_1 = arith.constant 0 : i32
    return %c0_i32, %c0_i32_0 : i32, i32
  }
  func.func @transform_7(%arg0: i32) -> (i32, i32) {
    %c0_i32 = arith.constant 0 : i32
    %c0_i32_0 = arith.constant 0 : i32
    %c0_i32_1 = arith.constant 0 : i32
    return %c0_i32, %c0_i32_0 : i32, i32
  }
  func.func @transform_8(%arg0: i32) -> (i32, i32) {
    %c0_i32 = arith.constant 0 : i32
    %c0_i32_0 = arith.constant 0 : i32
    %c0_i32_1 = arith.constant 0 : i32
    return %c0_i32, %c0_i32_0 : i32, i32
  }
  func.func @transform_9(%arg0: i32) -> (i32, i32) {
    %c0_i32 = arith.constant 0 : i32
    %c0_i32_0 = arith.constant 0 : i32
    %c0_i32_1 = arith.constant 0 : i32
    return %c0_i32, %c0_i32_0 : i32, i32
  }
  func.func @transform_10(%arg0: i32) -> (i32, i32) {
    %c0_i32 = arith.constant 0 : i32
    %c0_i32_0 = arith.constant 0 : i32
    %c0_i32_1 = arith.constant 0 : i32
    return %c0_i32, %c0_i32_0 : i32, i32
  }
  func.func @transform_11(%arg0: i32) -> (i32, i32) {
    %c0_i32 = arith.constant 0 : i32
    %c0_i32_0 = arith.constant 0 : i32
    %c0_i32_1 = arith.constant 0 : i32
    return %c0_i32, %c0_i32_0 : i32, i32
  }
  func.func @transform_12(%arg0: i32) -> (i32, i32) {
    %c0_i32 = arith.constant 0 : i32
    %c0_i32_0 = arith.constant 0 : i32
    %c0_i32_1 = arith.constant 0 : i32
    return %c0_i32, %c0_i32_0 : i32, i32
  }
  func.func @transform_13(%arg0: i32) -> (i32, i32, i32) {
    %c0_i32 = arith.constant 0 : i32
    %c0_i32_0 = arith.constant 0 : i32
    %c0_i32_1 = arith.constant 0 : i32
    return %arg0, %c0_i32, %c0_i32_0 : i32, i32, i32
  }
}

</mosaic_0001>

<llo_original>
// kernel: tpu_custom_call.1
$region0: #{tpu_custom_call.1}
  #allocation0 [shape = 'u32[]', space=smem, size = 0x4, offset = 0x4, fixed_abs, tag = 'smem constant byte address 0x4 - core index']
  #allocation1 [shape = 'u32[72,128]{1,0:T(1,128)}', space=vmem, size = 0x9000, scoped, tag = 'internal scratch']
  %s0 = inlined_call_operand.vmem [shape: f32[2,16,128], index: 0, kind: input, shape index: {}]
  %s1 = inlined_call_operand.vmem [shape: f32[3,128,96], index: 1, kind: input, shape index: {}]
  %s2 = inlined_call_operand.hbm [shape: f32[1,96], index: 2, kind: input, shape index: {}]
  %s3 = inlined_call_operand.vmem [shape: f32[3,96,96], index: 3, kind: input, shape index: {}]
  %s4 = inlined_call_operand.hbm [shape: f32[1,96], index: 4, kind: input, shape index: {}]
  %s5 = inlined_call_operand.vmem [shape: f32[96,128], index: 5, kind: input, shape index: {}]
  %s6 = inlined_call_operand.hbm [shape: f32[1,128], index: 6, kind: input, shape index: {}]
  %s7 = inlined_call_operand.vmem [shape: f32[128,128], index: 7, kind: input, shape index: {}]
  %s8 = inlined_call_operand.vmem [shape: f32[1,128], index: 8, kind: input, shape index: {}]
  %s9 = inlined_call_operand.vmem [shape: f32[128,128], index: 9, kind: input, shape index: {}]
  %s10 = inlined_call_operand.vmem [shape: f32[1,128], index: 10, kind: input, shape index: {}]
  %s11 = inlined_call_operand.hbm [shape: f32[9,128], index: 11, kind: input, shape index: {}]
  %s12 = inlined_call_operand.vmem [shape: f32[1,128], index: 12, kind: input, shape index: {}]
  %s13 = inlined_call_operand.hbm [shape: f32[2,16,128], index: 13, kind: output, shape index: {}]
  %s14 = sld [smem:[#allocation0]]
  $region101: #{tpu_custom_call.1} parent=0
    _
  %s16 = ssub.s32 1, %s14
  %s17 = scalar_select 0, %s16, %s14
  $region1: #{tpu_custom_call.1} parent=0
    #allocation2 [shape = 'u8[512]{0}', space=vmem, size = 0x400, scoped, tag = 'input window, operand 2, single buffered']
    #allocation3 [shape = 's32[2]{0}', space=sflag, size = 0x8, scoped, tag = 'scoped memory for tpu_custom_call.1']
    #allocation4 [shape = 's32[2]{0}', space=sflag, size = 0x8, scoped, tag = 'scoped memory for tpu_custom_call.1']
    #allocation5 [shape = 'u8[512]{0}', space=vmem, size = 0x400, scoped, tag = 'input window, operand 4, single buffered']
    #allocation6 [shape = 's32[1]{0}', space=sflag, size = 0x4, scoped, tag = 'scoped memory for tpu_custom_call.1']
    #allocation7 [shape = 'u8[512]{0}', space=vmem, size = 0x400, scoped, tag = 'input window, operand 6, single buffered']
    #allocation8 [shape = 'u8[8192]{0}', space=vmem, size = 0x2000, scoped, tag = 'input window, operand 11, single buffered']
    #allocation9 [shape = 's32[1]{0}', space=sflag, size = 0x4, scoped, tag = 'scoped memory for tpu_custom_call.1']
    #allocation10 [shape = 'u8[16384]{0}', space=vmem, size = 0x4000, scoped, tag = 'output window, operand 0']
    %18 = vsyncpa [#allocation3], 0
    %19 = vsyncpa [#allocation6], 0
    %20 = vsyncpa [#allocation9], 0
    %21 = vsyncpa [#allocation4], 0
    %s22 = scalar_lea.sflag [#allocation4], 1
    %23 = vsyncpa %s22, 0
    loop: start=0, step=1, limit=4
    $region2: #{tpu_custom_call.1} parent=1 // loop_pre_header
      _
    $region3: #{tpu_custom_call.1} parent=1 // loop_header
      %s25 = sphi 0, %s29
      %p26 = scmp.ge.s32.totalorder %s25, 4
      %s35 = sphi 0, %s37
      %s38 = sphi 0, %s35
      %s39 = sphi 0, %s38
      %s55 = sphi 0, %s39
      %s59 = sphi 0, %s59
      %s61 = sphi 0, %s59
      %s62 = sphi 0, %s61
      %s76 = sphi 0, %s62
      %s80 = sphi 0, %s80
      %s82 = sphi 0, %s80
      %s83 = sphi 0, %s82
      %s97 = sphi 0, %s83
      %s101 = sphi 0, %s101
      %s103 = sphi 0, %s101
      %s104 = sphi 0, %s103
      %s118 = sphi 0, %s104
      %s122 = sphi 0, %s122
      %s124 = sphi 0, %s122
      %s125 = sphi 0, %s124
      %s139 = sphi 0, %s125
      %s143 = sphi 0, %s143
      %s145 = sphi 0, %s143
      %s146 = sphi 0, %s145
      %s160 = sphi 0, %s146
      %s164 = sphi 0, %s164
      %s166 = sphi 0, %s164
      %s167 = sphi 0, %s166
      %s181 = sphi 0, %s167
      %s185 = sphi 0, %s185
      %s187 = sphi 0, %s185
      %s188 = sphi 0, %s187
      %s202 = sphi 0, %s188
      %s206 = sphi 0, %s206
      %s208 = sphi 0, %s206
      %s209 = sphi 0, %s208
      %s223 = sphi 0, %s209
      %s227 = sphi 0, %s227
      %s229 = sphi 0, %s227
      %s230 = sphi 0, %s229
      %s244 = sphi 0, %s230
      %s248 = sphi 0, %s248
      %s250 = sphi 0, %s248
      %s251 = sphi 0, %s250
      %s265 = sphi 0, %s251
      %s269 = sphi 0, %s269
      %s271 = sphi 0, %s269
      %s272 = sphi 0, %s271
      %s286 = sphi 0, %s272
      %s290 = sphi 0, %s290
      %s292 = sphi 0, %s290
      %s293 = sphi 0, %s292
      %s307 = sphi 0, %s293
      %s313 = sphi 0, %s315
      %s316 = sphi 0, %s313
      %s317 = sphi 0, %s316
      %s333 = sphi 0, %s317
    $region4: #{tpu_custom_call.1} parent=1 // loop_header_branch
      %28 = sbr.rel (%p26) target = $region8
    $region5: #{tpu_custom_call.1} parent=1 // loop_body
      %s30 = ssub.s32 %s25, 1
      %s31 = ssub.s32 %s25, 2
      %s32 = sadd.s32 %s25, 1
      %s33 = ssub.s32 %s25, %s32
      %p34 = scmp.eq.s32.totalorder %s33, 0
      %s36 = sadd.s32 %s35, 1
      %s37 = scalar_select %p34, %s35, %s36
      %p40 = pneg %p34
      %p41 = scmp.eq.s32.totalorder %s25, 1
      %p42 = por %p40, %p41
      %p43 = scmp.ne.s32.totalorder %s35, %s38
      %p44 = scmp.eq.s32.totalorder %s25, 0
      %p45 = por %p43, %p44
      %p46 = scmp.ne.s32.totalorder %s35, %s38
      %p47 = scmp.eq.s32.totalorder %s30, 1
      %p48 = por %p46, %p47
      %p49 = scmp.ne.s32.totalorder %s38, %s39
      %p50 = scmp.eq.s32.totalorder %s30, 0
      %p51 = por %p49, %p50
      %p52 = scmp.ne.s32.totalorder %s38, %s39
      %p53 = scmp.eq.s32.totalorder %s31, 1
      %p54 = por %p52, %p53
      %p56 = scmp.ne.s32.totalorder %s39, %s55
      %p57 = scmp.eq.s32.totalorder %s31, 0
      %p58 = por %p56, %p57
      %s60 = sadd.s32 %s59, 1
      %p63 = scmp.eq.s32.totalorder %s25, 1
      %p64 = scmp.ne.s32.totalorder %s59, %s61
      %p65 = scmp.eq.s32.totalorder %s25, 0
      %p66 = por %p64, %p65
      %p67 = scmp.ne.s32.totalorder %s59, %s61
      %p68 = scmp.eq.s32.totalorder %s30, 1
      %p69 = por %p67, %p68
      %p70 = scmp.ne.s32.totalorder %s61, %s62
      %p71 = scmp.eq.s32.totalorder %s30, 0
      %p72 = por %p70, %p71
      %p73 = scmp.ne.s32.totalorder %s61, %s62
      %p74 = scmp.eq.s32.totalorder %s31, 1
      %p75 = por %p73, %p74
      %p77 = scmp.ne.s32.totalorder %s62, %s76
      %p78 = scmp.eq.s32.totalorder %s31, 0
      %p79 = por %p77, %p78
      %s81 = sadd.s32 %s80, 1
      %p84 = scmp.eq.s32.totalorder %s25, 1
      %p85 = scmp.ne.s32.totalorder %s80, %s82
      %p86 = scmp.eq.s32.totalorder %s25, 0
      %p87 = por %p85, %p86
      %p88 = scmp.ne.s32.totalorder %s80, %s82
      %p89 = scmp.eq.s32.totalorder %s30, 1
      %p90 = por %p88, %p89
      %p91 = scmp.ne.s32.totalorder %s82, %s83
      %p92 = scmp.eq.s32.totalorder %s30, 0
      %p93 = por %p91, %p92
      %p94 = scmp.ne.s32.totalorder %s82, %s83
      %p95 = scmp.eq.s32.totalorder %s31, 1
      %p96 = por %p94, %p95
      %p98 = scmp.ne.s32.totalorder %s83, %s97
      %p99 = scmp.eq.s32.totalorder %s31, 0
      %p100 = por %p98, %p99
      %s102 = sadd.s32 %s101, 1
      %p105 = scmp.eq.s32.totalorder %s25, 1
      %p106 = scmp.ne.s32.totalorder %s101, %s103
      %p107 = scmp.eq.s32.totalorder %s25, 0
      %p108 = por %p106, %p107
      %p109 = scmp.ne.s32.totalorder %s101, %s103
      %p110 = scmp.eq.s32.totalorder %s30, 1
      %p111 = por %p109, %p110
      %p112 = scmp.ne.s32.totalorder %s103, %s104
      %p113 = scmp.eq.s32.totalorder %s30, 0
      %p114 = por %p112, %p113
      %p115 = scmp.ne.s32.totalorder %s103, %s104
      %p116 = scmp.eq.s32.totalorder %s31, 1
      %p117 = por %p115, %p116
      %p119 = scmp.ne.s32.totalorder %s104, %s118
      %p120 = scmp.eq.s32.totalorder %s31, 0
      %p121 = por %p119, %p120
      %s123 = sadd.s32 %s122, 1
      %p126 = scmp.eq.s32.totalorder %s25, 1
      %p127 = scmp.ne.s32.totalorder %s122, %s124
      %p128 = scmp.eq.s32.totalorder %s25, 0
      %p129 = por %p127, %p128
      %p130 = scmp.ne.s32.totalorder %s122, %s124
      %p131 = scmp.eq.s32.totalorder %s30, 1
      %p132 = por %p130, %p131
      %p133 = scmp.ne.s32.totalorder %s124, %s125
      %p134 = scmp.eq.s32.totalorder %s30, 0
      %p135 = por %p133, %p134
      %p136 = scmp.ne.s32.totalorder %s124, %s125
      %p137 = scmp.eq.s32.totalorder %s31, 1
      %p138 = por %p136, %p137
      %p140 = scmp.ne.s32.totalorder %s125, %s139
      %p141 = scmp.eq.s32.totalorder %s31, 0
      %p142 = por %p140, %p141
      %s144 = sadd.s32 %s143, 1
      %p147 = scmp.eq.s32.totalorder %s25, 1
      %p148 = scmp.ne.s32.totalorder %s143, %s145
      %p149 = scmp.eq.s32.totalorder %s25, 0
      %p150 = por %p148, %p149
      %p151 = scmp.ne.s32.totalorder %s143, %s145
      %p152 = scmp.eq.s32.totalorder %s30, 1
      %p153 = por %p151, %p152
      %p154 = scmp.ne.s32.totalorder %s145, %s146
      %p155 = scmp.eq.s32.totalorder %s30, 0
      %p156 = por %p154, %p155
      %p157 = scmp.ne.s32.totalorder %s145, %s146
      %p158 = scmp.eq.s32.totalorder %s31, 1
      %p159 = por %p157, %p158
      %p161 = scmp.ne.s32.totalorder %s146, %s160
      %p162 = scmp.eq.s32.totalorder %s31, 0
      %p163 = por %p161, %p162
      %s165 = sadd.s32 %s164, 1
      %p168 = scmp.eq.s32.totalorder %s25, 1
      %p169 = scmp.ne.s32.totalorder %s164, %s166
      %p170 = scmp.eq.s32.totalorder %s25, 0
      %p171 = por %p169, %p170
      %p172 = scmp.ne.s32.totalorder %s164, %s166
      %p173 = scmp.eq.s32.totalorder %s30, 1
      %p174 = por %p172, %p173
      %p175 = scmp.ne.s32.totalorder %s166, %s167
      %p176 = scmp.eq.s32.totalorder %s30, 0
      %p177 = por %p175, %p176
      %p178 = scmp.ne.s32.totalorder %s166, %s167
      %p179 = scmp.eq.s32.totalorder %s31, 1
      %p180 = por %p178, %p179
      %p182 = scmp.ne.s32.totalorder %s167, %s181
      %p183 = scmp.eq.s32.totalorder %s31, 0
      %p184 = por %p182, %p183
      %s186 = sadd.s32 %s185, 1
      %p189 = scmp.eq.s32.totalorder %s25, 1
      %p190 = scmp.ne.s32.totalorder %s185, %s187
      %p191 = scmp.eq.s32.totalorder %s25, 0
      %p192 = por %p190, %p191
      %p193 = scmp.ne.s32.totalorder %s185, %s187
      %p194 = scmp.eq.s32.totalorder %s30, 1
      %p195 = por %p193, %p194
      %p196 = scmp.ne.s32.totalorder %s187, %s188
      %p197 = scmp.eq.s32.totalorder %s30, 0
      %p198 = por %p196, %p197
      %p199 = scmp.ne.s32.totalorder %s187, %s188
      %p200 = scmp.eq.s32.totalorder %s31, 1
      %p201 = por %p199, %p200
      %p203 = scmp.ne.s32.totalorder %s188, %s202
      %p204 = scmp.eq.s32.totalorder %s31, 0
      %p205 = por %p203, %p204
      %s207 = sadd.s32 %s206, 1
      %p210 = scmp.eq.s32.totalorder %s25, 1
      %p211 = scmp.ne.s32.totalorder %s206, %s208
      %p212 = scmp.eq.s32.totalorder %s25, 0
      %p213 = por %p211, %p212
      %p214 = scmp.ne.s32.totalorder %s206, %s208
      %p215 = scmp.eq.s32.totalorder %s30, 1
      %p216 = por %p214, %p215
      %p217 = scmp.ne.s32.totalorder %s208, %s209
      %p218 = scmp.eq.s32.totalorder %s30, 0
      %p219 = por %p217, %p218
      %p220 = scmp.ne.s32.totalorder %s208, %s209
      %p221 = scmp.eq.s32.totalorder %s31, 1
      %p222 = por %p220, %p221
      %p224 = scmp.ne.s32.totalorder %s209, %s223
      %p225 = scmp.eq.s32.totalorder %s31, 0
      %p226 = por %p224, %p225
      %s228 = sadd.s32 %s227, 1
      %p231 = scmp.eq.s32.totalorder %s25, 1
      %p232 = scmp.ne.s32.totalorder %s227, %s229
      %p233 = scmp.eq.s32.totalorder %s25, 0
      %p234 = por %p232, %p233
      %p235 = scmp.ne.s32.totalorder %s227, %s229
      %p236 = scmp.eq.s32.totalorder %s30, 1
      %p237 = por %p235, %p236
      %p238 = scmp.ne.s32.totalorder %s229, %s230
      %p239 = scmp.eq.s32.totalorder %s30, 0
      %p240 = por %p238, %p239
      %p241 = scmp.ne.s32.totalorder %s229, %s230
      %p242 = scmp.eq.s32.totalorder %s31, 1
      %p243 = por %p241, %p242
      %p245 = scmp.ne.s32.totalorder %s230, %s244
      %p246 = scmp.eq.s32.totalorder %s31, 0
      %p247 = por %p245, %p246
      %s249 = sadd.s32 %s248, 1
      %p252 = scmp.eq.s32.totalorder %s25, 1
      %p253 = scmp.ne.s32.totalorder %s248, %s250
      %p254 = scmp.eq.s32.totalorder %s25, 0
      %p255 = por %p253, %p254
      %p256 = scmp.ne.s32.totalorder %s248, %s250
      %p257 = scmp.eq.s32.totalorder %s30, 1
      %p258 = por %p256, %p257
      %p259 = scmp.ne.s32.totalorder %s250, %s251
      %p260 = scmp.eq.s32.totalorder %s30, 0
      %p261 = por %p259, %p260
      %p262 = scmp.ne.s32.totalorder %s250, %s251
      %p263 = scmp.eq.s32.totalorder %s31, 1
      %p264 = por %p262, %p263
      %p266 = scmp.ne.s32.totalorder %s251, %s265
      %p267 = scmp.eq.s32.totalorder %s31, 0
      %p268 = por %p266, %p267
      %s270 = sadd.s32 %s269, 1
      %p273 = scmp.eq.s32.totalorder %s25, 1
      %p274 = scmp.ne.s32.totalorder %s269, %s271
      %p275 = scmp.eq.s32.totalorder %s25, 0
      %p276 = por %p274, %p275
      %p277 = scmp.ne.s32.totalorder %s269, %s271
      %p278 = scmp.eq.s32.totalorder %s30, 1
      %p279 = por %p277, %p278
      %p280 = scmp.ne.s32.totalorder %s271, %s272
      %p281 = scmp.eq.s32.totalorder %s30, 0
      %p282 = por %p280, %p281
      %p283 = scmp.ne.s32.totalorder %s271, %s272
      %p284 = scmp.eq.s32.totalorder %s31, 1
      %p285 = por %p283, %p284
      %p287 = scmp.ne.s32.totalorder %s272, %s286
      %p288 = scmp.eq.s32.totalorder %s31, 0
      %p289 = por %p287, %p288
      %s291 = sadd.s32 %s290, 1
      %p294 = scmp.eq.s32.totalorder %s25, 1
      %p295 = scmp.ne.s32.totalorder %s290, %s292
      %p296 = scmp.eq.s32.totalorder %s25, 0
      %p297 = por %p295, %p296
      %p298 = scmp.ne.s32.totalorder %s290, %s292
      %p299 = scmp.eq.s32.totalorder %s30, 1
      %p300 = por %p298, %p299
      %p301 = scmp.ne.s32.totalorder %s292, %s293
      %p302 = scmp.eq.s32.totalorder %s30, 0
      %p303 = por %p301, %p302
      %p304 = scmp.ne.s32.totalorder %s292, %s293
      %p305 = scmp.eq.s32.totalorder %s31, 1
      %p306 = por %p304, %p305
      %p308 = scmp.ne.s32.totalorder %s293, %s307
      %p309 = scmp.eq.s32.totalorder %s31, 0
      %p310 = por %p308, %p309
      %s311 = ssub.s32 %s25, %s32
      %p312 = scmp.eq.s32.totalorder %s311, 0
      %s314 = sadd.s32 %s313, 1
      %s315 = scalar_select %p312, %s313, %s314
      %p318 = pneg %p312
      %p319 = scmp.eq.s32.totalorder %s25, 1
      %p320 = por %p318, %p319
      %p321 = scmp.ne.s32.totalorder %s313, %s316
      %p322 = scmp.eq.s32.totalorder %s25, 0
      %p323 = por %p321, %p322
      %p324 = scmp.ne.s32.totalorder %s313, %s316
      %p325 = scmp.eq.s32.totalorder %s30, 1
      %p326 = por %p324, %p325
      %p327 = scmp.ne.s32.totalorder %s316, %s317
      %p328 = scmp.eq.s32.totalorder %s30, 0
      %p329 = por %p327, %p328
      %p330 = scmp.ne.s32.totalorder %s316, %s317
      %p331 = scmp.eq.s32.totalorder %s31, 1
      %p332 = por %p330, %p331
      %p334 = scmp.ne.s32.totalorder %s317, %s333
      %p335 = scmp.eq.s32.totalorder %s31, 0
      %p336 = por %p334, %p335
      %p337 = scmp.le.s32.totalorder 1, %s25
      %p338 = scmp.lt.s32.totalorder %s25, 3
      %p339 = pnand %p337, %p338
      %p340 = pneg %p339
      // Predicated region
      $region9: #{tpu_custom_call.1} parent=5 // pred_check
        _
      $region10: #{tpu_custom_call.1} parent=5 // pred_check_branch
        %342 = sbr.rel (%p339) target = $region12
      $region11: #{tpu_custom_call.1} parent=5 // pred_region
        %s343 = ssub.s32 %s25, 1
        // Predicated region
        $region13: #{tpu_custom_call.1} parent=11 // pred_check
          %p344 = pneg %p72
        $region14: #{tpu_custom_call.1} parent=11 // pred_check_branch
          %346 = sbr.rel (%p344) target = $region16
        $region15: #{tpu_custom_call.1} parent=11 // pred_region
          _
        $region16: #{tpu_custom_call.1} parent=11 // pred_fallthru
          _
        // Predicated region
        $region17: #{tpu_custom_call.1} parent=11 // pred_check
          %p347 = pneg %p93
        $region18: #{tpu_custom_call.1} parent=11 // pred_check_branch
          %349 = sbr.rel (%p347) target = $region20
        $region19: #{tpu_custom_call.1} parent=11 // pred_region
          %351 = vsyncadd [#allocation3], 0
          %s353 = sshll.u32 %s2, 4
          %s354 = int_to_ptr.hbm [resolvable:$true] %s353
          %s355 = sshll.u32 [#allocation2], 4
          %s356 = int_to_ptr.vmem [resolvable:$true] %s355
          %358 = dma.hbm_to_vmem [thread:$0]  %s354, 16, %s356, [#allocation3]
        $region20: #{tpu_custom_call.1} parent=11 // pred_fallthru
          _
        // Predicated region
        $region21: #{tpu_custom_call.1} parent=11 // pred_check
          %p359 = pneg %p114
        $region22: #{tpu_custom_call.1} parent=11 // pred_check_branch
          %361 = sbr.rel (%p359) target = $region24
        $region23: #{tpu_custom_call.1} parent=11 // pred_region
          _
        $region24: #{tpu_custom_call.1} parent=11 // pred_fallthru
          _
        // Predicated region
        $region25: #{tpu_custom_call.1} parent=11 // pred_check
          %p362 = pneg %p135
        $region26: #{tpu_custom_call.1} parent=11 // pred_check_branch
          %364 = sbr.rel (%p362) target = $region28
        $region27: #{tpu_custom_call.1} parent=11 // pred_region
          %366 = vsyncadd [#allocation6], 0
          %s368 = sshll.u32 %s4, 4
          %s369 = int_to_ptr.hbm [resolvable:$true] %s368
          %s370 = sshll.u32 [#allocation5], 4
          %s371 = int_to_ptr.vmem [resolvable:$true] %s370
          %373 = dma.hbm_to_vmem [thread:$0]  %s369, 16, %s371, [#allocation6]
        $region28: #{tpu_custom_call.1} parent=11 // pred_fallthru
          _
        // Predicated region
        $region29: #{tpu_custom_call.1} parent=11 // pred_check
          %p374 = pneg %p156
        $region30: #{tpu_custom_call.1} parent=11 // pred_check_branch
          %376 = sbr.rel (%p374) target = $region32
        $region31: #{tpu_custom_call.1} parent=11 // pred_region
          _
        $region32: #{tpu_custom_call.1} parent=11 // pred_fallthru
          _
        // Predicated region
        $region33: #{tpu_custom_call.1} parent=11 // pred_check
          %p377 = pneg %p177
        $region34: #{tpu_custom_call.1} parent=11 // pred_check_branch
          %379 = sbr.rel (%p377) target = $region36
        $region35: #{tpu_custom_call.1} parent=11 // pred_region
          %381 = vsyncadd [#allocation6], 0
          %s383 = sshll.u32 %s6, 4
          %s384 = int_to_ptr.hbm [resolvable:$true] %s383
          %s385 = sshll.u32 [#allocation7], 4
          %s386 = int_to_ptr.vmem [resolvable:$true] %s385
          %388 = dma.hbm_to_vmem [thread:$0]  %s384, 16, %s386, [#allocation6]
        $region36: #{tpu_custom_call.1} parent=11 // pred_fallthru
          _
        // Predicated region
        $region37: #{tpu_custom_call.1} parent=11 // pred_check
          %p389 = pneg %p198
        $region38: #{tpu_custom_call.1} parent=11 // pred_check_branch
          %391 = sbr.rel (%p389) target = $region40
        $region39: #{tpu_custom_call.1} parent=11 // pred_region
          _
        $region40: #{tpu_custom_call.1} parent=11 // pred_fallthru
          _
        // Predicated region
        $region41: #{tpu_custom_call.1} parent=11 // pred_check
          %p392 = pneg %p219
        $region42: #{tpu_custom_call.1} parent=11 // pred_check_branch
          %394 = sbr.rel (%p392) target = $region44
        $region43: #{tpu_custom_call.1} parent=11 // pred_region
          _
        $region44: #{tpu_custom_call.1} parent=11 // pred_fallthru
          _
        // Predicated region
        $region45: #{tpu_custom_call.1} parent=11 // pred_check
          %p395 = pneg %p240
        $region46: #{tpu_custom_call.1} parent=11 // pred_check_branch
          %397 = sbr.rel (%p395) target = $region48
        $region47: #{tpu_custom_call.1} parent=11 // pred_region
          _
        $region48: #{tpu_custom_call.1} parent=11 // pred_fallthru
          _
        // Predicated region
        $region49: #{tpu_custom_call.1} parent=11 // pred_check
          %p398 = pneg %p261
        $region50: #{tpu_custom_call.1} parent=11 // pred_check_branch
          %400 = sbr.rel (%p398) target = $region52
        $region51: #{tpu_custom_call.1} parent=11 // pred_region
          _
        $region52: #{tpu_custom_call.1} parent=11 // pred_fallthru
          _
        // Predicated region
        $region53: #{tpu_custom_call.1} parent=11 // pred_check
          %p401 = pneg %p282
        $region54: #{tpu_custom_call.1} parent=11 // pred_check_branch
          %403 = sbr.rel (%p401) target = $region56
        $region55: #{tpu_custom_call.1} parent=11 // pred_region
          %405 = vsyncadd [#allocation9], 0
          %s406 = sshll.u32 %s11, 4
          %s407 = int_to_ptr.hbm [resolvable:$true] %s406
          %s408 = sshll.u32 [#allocation8], 4
          %s409 = int_to_ptr.vmem [resolvable:$true] %s408
          %414 = dma.hbm_to_vmem [thread:$0]  %s407, 256, %s409, [#allocation9], 128, 128, 8
        $region56: #{tpu_custom_call.1} parent=11 // pred_fallthru
          _
        // Predicated region
        $region57: #{tpu_custom_call.1} parent=11 // pred_check
          %p415 = pneg %p303
        $region58: #{tpu_custom_call.1} parent=11 // pred_check_branch
          %417 = sbr.rel (%p415) target = $region60
        $region59: #{tpu_custom_call.1} parent=11 // pred_region
          _
        $region60: #{tpu_custom_call.1} parent=11 // pred_fallthru
          _
      $region12: #{tpu_custom_call.1} parent=5 // pred_fallthru
        _
      %p418 = scmp.lt.s32.totalorder %s25, 2
      // Predicated region
      $region61: #{tpu_custom_call.1} parent=5 // pred_check
        %p419 = pneg %p418
      $region62: #{tpu_custom_call.1} parent=5 // pred_check_branch
        %421 = sbr.rel (%p419) target = $region64
      $region63: #{tpu_custom_call.1} parent=5 // pred_region
        // Predicated region
        $region65: #{tpu_custom_call.1} parent=63 // pred_check
          %p422 = pneg %p45
        $region66: #{tpu_custom_call.1} parent=63 // pred_check_branch
          %424 = sbr.rel (%p422) target = $region68
        $region67: #{tpu_custom_call.1} parent=63 // pred_region
          %p425 = scmp.lt.s32.totalorder %s25, 1
          %s426 = scalar_select %p425, %s25, 1
          %s427 = smul.addr %s426, 2
          %s428 = smul.addr %s427, 8
          %s429 = scalar_lea.vmem %s0, %s428
        $region68: #{tpu_custom_call.1} parent=63 // pred_fallthru
          _
      $region64: #{tpu_custom_call.1} parent=5 // pred_fallthru
        _
      %p430 = scmp.le.s32.totalorder 1, %s25
      %p431 = scmp.lt.s32.totalorder %s25, 3
      %p432 = pnand %p430, %p431
      %p433 = pneg %p432
      // Predicated region
      $region69: #{tpu_custom_call.1} parent=5 // pred_check
        _
      $region70: #{tpu_custom_call.1} parent=5 // pred_check_branch
        %435 = sbr.rel (%p432) target = $region72
      $region71: #{tpu_custom_call.1} parent=5 // pred_region
        %s436 = ssub.s32 %s25, 1
        // Predicated region
        $region73: #{tpu_custom_call.1} parent=71 // pred_check
          %p437 = pneg %p93
        $region74: #{tpu_custom_call.1} parent=71 // pred_check_branch
          %439 = sbr.rel (%p437) target = $region76
        $region75: #{tpu_custom_call.1} parent=71 // pred_region
          %441 = dma.done [#allocation3], 16
        $region76: #{tpu_custom_call.1} parent=71 // pred_fallthru
          _
        // Predicated region
        $region77: #{tpu_custom_call.1} parent=71 // pred_check
          %p442 = pneg %p135
        $region78: #{tpu_custom_call.1} parent=71 // pred_check_branch
          %444 = sbr.rel (%p442) target = $region80
        $region79: #{tpu_custom_call.1} parent=71 // pred_region
          %446 = dma.done [#allocation6], 16
        $region80: #{tpu_custom_call.1} parent=71 // pred_fallthru
          _
        // Predicated region
        $region81: #{tpu_custom_call.1} parent=71 // pred_check
          %p447 = pneg %p177
        $region82: #{tpu_custom_call.1} parent=71 // pred_check_branch
          %449 = sbr.rel (%p447) target = $region84
        $region83: #{tpu_custom_call.1} parent=71 // pred_region
          %451 = dma.done [#allocation6], 16
        $region84: #{tpu_custom_call.1} parent=71 // pred_fallthru
          _
        // Predicated region
        $region85: #{tpu_custom_call.1} parent=71 // pred_check
          %p452 = pneg %p282
        $region86: #{tpu_custom_call.1} parent=71 // pred_check_branch
          %454 = sbr.rel (%p452) target = $region88
        $region87: #{tpu_custom_call.1} parent=71 // pred_region
          %456 = dma.done [#allocation9], 256
        $region88: #{tpu_custom_call.1} parent=71 // pred_fallthru
          _
        %p457 = scmp.lt.s32.totalorder %s30, 1
        %s458 = scalar_select %p457, %s30, 1
        %s459 = smul.addr %s458, 2
        %s460 = smul.addr %s459, 8
        %s461 = scalar_lea.vmem %s0, %s460
        %p462 = pneg %p51
        %p463 = pneg %p48
        %p464 = pneg %p72
        %p465 = pneg %p69
        %p466 = pneg %p93
        %p467 = pneg %p90
        %p468 = pneg %p114
        %p469 = pneg %p111
        %p470 = pneg %p135
        %p471 = pneg %p132
        %p472 = pneg %p156
        %p473 = pneg %p153
        %p474 = pneg %p177
        %p475 = pneg %p174
        %p476 = pneg %p198
        %p477 = pneg %p195
        %p478 = pneg %p219
        %p479 = pneg %p216
        %p480 = pneg %p240
        %p481 = pneg %p237
        %p482 = pneg %p261
        %p483 = pneg %p258
        %p484 = pneg %p282
        %p485 = pneg %p279
        %p486 = pneg %p303
        %p487 = pneg %p300
        %p488 = pneg %p329
        %p489 = pneg %p326
        %s490 = sand.u32 %s316, 1
        %s491 = scalar_lea.sflag [#allocation4], %s490
        %s492 = sand.u32 %s316, 1
        %s493 = smul.addr %s492, 16
        %s494 = scalar_lea.vmem [#allocation10], %s493
        %p495 = scmp.lt.s32.totalorder %s30, 1
        %s496 = scalar_select %p495, %s30, 1
        %s497 = smul.addr %s496, 2
        %s498 = smul.addr %s497, 8
        %s499 = scalar_lea.vmem %s0, %s498
        %v500 = vld [vmem:[%s499] sm:$0xff]
        %v501 = vld [vmem:[%s499 + $0x8] sm:$0xff]
        %v502 = vlaneseq
        %v503 = vshrl.u32 %v502, 7
        %v504 = vadd.s32 %v503, 8
        %v505 = vlaneseq
        %v506 = vand.u32 %v505, 127
        %vm507 = vcmp.ge.s32.totalorder %v503, 1
        %vm508 = vcmp.ge.s32.totalorder %v504, 1
        %vm509 = vcmp.lt.s32.totalorder %v503, 15
        %vm510 = vcmp.lt.s32.totalorder %v504, 15
        %vm511 = vcmp.ge.s32.totalorder %v506, 8
        %vm512 = vcmp.lt.s32.totalorder %v506, 120
        %s513 = scalar_lea.vmem %s1, 128
        %v514 = vld [vmem:[%s513] sm:$0xff]
        %v515 = vld [vmem:[%s513 + $0x8] sm:$0xff]
        %v516 = vld [vmem:[%s513 + $0x10] sm:$0xff]
        %v517 = vld [vmem:[%s513 + $0x18] sm:$0xff]
        %v518 = vld [vmem:[%s513 + $0x20] sm:$0xff]
        %v519 = vld [vmem:[%s513 + $0x28] sm:$0xff]
        %v520 = vld [vmem:[%s513 + $0x30] sm:$0xff]
        %v521 = vld [vmem:[%s513 + $0x38] sm:$0xff]
        %v522 = vld [vmem:[%s513 + $0x40] sm:$0xff]
        %v523 = vld [vmem:[%s513 + $0x48] sm:$0xff]
        %v524 = vld [vmem:[%s513 + $0x50] sm:$0xff]
        %v525 = vld [vmem:[%s513 + $0x58] sm:$0xff]
        %v526 = vld [vmem:[%s513 + $0x60] sm:$0xff]
        %v527 = vld [vmem:[%s513 + $0x68] sm:$0xff]
        %v528 = vld [vmem:[%s513 + $0x70] sm:$0xff]
        %v529 = vld [vmem:[%s513 + $0x78] sm:$0xff]
        %v530 = vrot.slane %v500, 7
        %v531 = vrot.slane %v501, 7
        %vm532 = vcmp.lt.s32.totalorder %v503, 1
        %v533 = vsel %vm532, %v530, %v531
        %v534 = vsel %vm532, %v531, %v530
        %v535 = vsel %vm507, 1, 0
        %v536 = vsel %vm508, 1, 0
        %vm537 = vcmp.eq.s32.totalorder %v535, 1
        %vm538 = vcmp.eq.s32.totalorder %v536, 1
        %v539 = vsel %vm537, %v534, 0.0
        %v540 = vsel %vm538, %v533, 0.0
        %v541 = vld [vmem:[%s1] sm:$0xff]
        %v542 = vld [vmem:[%s1 + $0x8] sm:$0xff]
        %v543 = vld [vmem:[%s1 + $0x10] sm:$0xff]
        %v544 = vld [vmem:[%s1 + $0x18] sm:$0xff]
        %v545 = vld [vmem:[%s1 + $0x20] sm:$0xff]
        %v546 = vld [vmem:[%s1 + $0x28] sm:$0xff]
        %v547 = vld [vmem:[%s1 + $0x30] sm:$0xff]
        %v548 = vld [vmem:[%s1 + $0x38] sm:$0xff]
        %v549 = vld [vmem:[%s1 + $0x40] sm:$0xff]
        %v550 = vld [vmem:[%s1 + $0x48] sm:$0xff]
        %v551 = vld [vmem:[%s1 + $0x50] sm:$0xff]
        %v552 = vld [vmem:[%s1 + $0x58] sm:$0xff]
        %v553 = vld [vmem:[%s1 + $0x60] sm:$0xff]
        %v554 = vld [vmem:[%s1 + $0x68] sm:$0xff]
        %v555 = vld [vmem:[%s1 + $0x70] sm:$0xff]
        %v556 = vld [vmem:[%s1 + $0x78] sm:$0xff]
        %557 = vmatpush.msra.mxu0 %v556
        %558 = vmatpush.msra.mxu0 %v555
        %559 = vmatpush.msra.mxu0 %v554
        %560 = vmatpush.msra.mxu0 %v553
        %561 = vmatpush.msra.mxu0 %v552
        %562 = vmatpush.msra.mxu0 %v551
        %563 = vmatpush.msra.mxu0 %v550
        %564 = vmatpush.msra.mxu0 %v549
        %565 = vmatpush.msra.mxu0 %v548
        %566 = vmatpush.msra.mxu0 %v547
        %567 = vmatpush.msra.mxu0 %v546
        %568 = vmatpush.msra.mxu0 %v545
        %569 = vmatpush.msra.mxu0 %v544
        %570 = vmatpush.msra.mxu0 %v543
        %571 = vmatpush.msra.mxu0 %v542
        %572 = vmatpush.msra.mxu0 %v541
        %573 = vmatmul.f32.gmra.mxu0 %v539
        %v574 = vpop.f32.mrf.mxu0
        %v575 = vadd.f32 0.0, %v574
        %576 = vmatmul.f32.gmra.mxu0 %v540
        %v577 = vpop.f32.mrf.mxu0
        %v578 = vadd.f32 0.0, %v577
        %579 = vdwg.mxu0
        %580 = vmatpush.msra.mxu0 %v529
        %581 = vmatpush.msra.mxu0 %v528
        %582 = vmatpush.msra.mxu0 %v527
        %583 = vmatpush.msra.mxu0 %v526
        %584 = vmatpush.msra.mxu0 %v525
        %585 = vmatpush.msra.mxu0 %v524
        %586 = vmatpush.msra.mxu0 %v523
        %587 = vmatpush.msra.mxu0 %v522
        %588 = vmatpush.msra.mxu0 %v521
        %589 = vmatpush.msra.mxu0 %v520
        %590 = vmatpush.msra.mxu0 %v519
        %591 = vmatpush.msra.mxu0 %v518
        %592 = vmatpush.msra.mxu0 %v517
        %593 = vmatpush.msra.mxu0 %v516
        %594 = vmatpush.msra.mxu0 %v515
        %595 = vmatpush.msra.mxu0 %v514
        %596 = vmatmul.f32.gmra.mxu0 %v500
        %v597 = vpop.f32.mrf.mxu0
        %v598 = vadd.f32 %v575, %v597
        %599 = vmatmul.f32.gmra.mxu0 %v501
        %v600 = vpop.f32.mrf.mxu0
        %v601 = vadd.f32 %v578, %v600
        %602 = vdwg.mxu0
        %v603 = vrot.slane %v500, 1
        %v604 = vrot.slane %v501, 1
        %vm605 = vcmp.lt.s32.totalorder %v503, 7
        %v606 = vsel %vm605, %v603, %v604
        %v607 = vsel %vm605, %v604, %v603
        %v608 = vsel %vm509, 1, 0
        %v609 = vsel %vm510, 1, 0
        %vm610 = vcmp.eq.s32.totalorder %v608, 1
        %vm611 = vcmp.eq.s32.totalorder %v609, 1
        %v612 = vsel %vm610, %v606, 0.0
        %v613 = vsel %vm611, %v607, 0.0
        %s614 = scalar_lea.vmem %s1, 256
        %v615 = vld [vmem:[%s614] sm:$0xff]
        %v616 = vld [vmem:[%s614 + $0x8] sm:$0xff]
        %v617 = vld [vmem:[%s614 + $0x10] sm:$0xff]
        %v618 = vld [vmem:[%s614 + $0x18] sm:$0xff]
        %v619 = vld [vmem:[%s614 + $0x20] sm:$0xff]
        %v620 = vld [vmem:[%s614 + $0x28] sm:$0xff]
        %v621 = vld [vmem:[%s614 + $0x30] sm:$0xff]
        %v622 = vld [vmem:[%s614 + $0x38] sm:$0xff]
        %v623 = vld [vmem:[%s614 + $0x40] sm:$0xff]
        %v624 = vld [vmem:[%s614 + $0x48] sm:$0xff]
        %v625 = vld [vmem:[%s614 + $0x50] sm:$0xff]
        %v626 = vld [vmem:[%s614 + $0x58] sm:$0xff]
        %v627 = vld [vmem:[%s614 + $0x60] sm:$0xff]
        %v628 = vld [vmem:[%s614 + $0x68] sm:$0xff]
        %v629 = vld [vmem:[%s614 + $0x70] sm:$0xff]
        %v630 = vld [vmem:[%s614 + $0x78] sm:$0xff]
        %631 = vmatpush.msra.mxu0 %v630
        %632 = vmatpush.msra.mxu0 %v629
        %633 = vmatpush.msra.mxu0 %v628
        %634 = vmatpush.msra.mxu0 %v627
        %635 = vmatpush.msra.mxu0 %v626
        %636 = vmatpush.msra.mxu0 %v625
        %637 = vmatpush.msra.mxu0 %v624
        %638 = vmatpush.msra.mxu0 %v623
        %639 = vmatpush.msra.mxu0 %v622
        %640 = vmatpush.msra.mxu0 %v621
        %641 = vmatpush.msra.mxu0 %v620
        %642 = vmatpush.msra.mxu0 %v619
        %643 = vmatpush.msra.mxu0 %v618
        %644 = vmatpush.msra.mxu0 %v617
        %645 = vmatpush.msra.mxu0 %v616
        %646 = vmatpush.msra.mxu0 %v615
        %647 = vmatmul.f32.gmra.mxu0 %v612
        %v648 = vpop.f32.mrf.mxu0
        %v649 = vadd.f32 0.0, %v648
        %650 = vmatmul.f32.gmra.mxu0 %v613
        %v651 = vpop.f32.mrf.mxu0
        %v652 = vadd.f32 0.0, %v651
        %653 = vdwg.mxu0
        %v654 = vadd.f32 %v598, %v649
        %v655 = vadd.f32 %v601, %v652
        %v656 = vld [vmem:[#allocation2] sm:$0x1]
        %v658 = vperm.slane %v656, 0
        %v660 = vadd.f32 %v654, %v658
        %v661 = vadd.f32 %v655, %v658
        %v662 = vxor.u32 %v660, 2147483648
        %v663 = vxor.u32 %v661, 2147483648
        %v664 = vmul.f32 %v662, 1.442695
        %v665 = vpow.pop %v664
        %v666 = vmul.f32 %v663, 1.442695
        %v667 = vpow.pop %v666
        %v668 = vadd.f32 %v665, 1.0
        %v669 = vadd.f32 %v667, 1.0
        %v670 = vrcp.pop %v668
        %v671 = vmul.f32 %v668, %v670
        %v672 = vsub.f32 1.0, %v671
        %v673 = vmul.f32 %v670, %v672
        %v674 = vadd.f32 %v670, %v673
        %vm675 = vweird.f32 %v668
        %vm676 = vweird.f32 %v670
        %vm677 = vmor %vm675, %vm676
        %v678 = vsel %vm677, %v670, %v674
        %v679 = vand.u32 2147483647, %v668
        %vm680 = vcmp.eq.f32.partialorder %v679, 8.507059e+37
        %v681 = vand.u32 %v668, 2147483648
        %v682 = vor.u32 1.1754944e-38, %v681
        %v683 = vsel %vm680, %v682, %v678
        %v684 = vmul.f32 1.0, %v683
        %v685 = vrcp.pop %v669
        %v686 = vmul.f32 %v669, %v685
        %v687 = vsub.f32 1.0, %v686
        %v688 = vmul.f32 %v685, %v687
        %v689 = vadd.f32 %v685, %v688
        %vm690 = vweird.f32 %v669
        %vm691 = vweird.f32 %v685
        %vm692 = vmor %vm690, %vm691
        %v693 = vsel %vm692, %v685, %v689
        %v694 = vand.u32 2147483647, %v669
        %vm695 = vcmp.eq.f32.partialorder %v694, 8.507059e+37
        %v696 = vand.u32 %v669, 2147483648
        %v697 = vor.u32 1.1754944e-38, %v696
        %v698 = vsel %vm695, %v697, %v693
        %v699 = vmul.f32 1.0, %v698
        %v700 = vmul.f32 %v660, %v684
        %v701 = vmul.f32 %v661, %v699
        %s702 = scalar_lea.vmem %s3, 96
        %v703 = vld [vmem:[%s702] sm:$0xff]
        %v704 = vld [vmem:[%s702 + $0x8] sm:$0xff]
        %v705 = vld [vmem:[%s702 + $0x10] sm:$0xff]
        %v706 = vld [vmem:[%s702 + $0x18] sm:$0xff]
        %v707 = vld [vmem:[%s702 + $0x20] sm:$0xff]
        %v708 = vld [vmem:[%s702 + $0x28] sm:$0xff]
        %v709 = vld [vmem:[%s702 + $0x30] sm:$0xff]
        %v710 = vld [vmem:[%s702 + $0x38] sm:$0xff]
        %v711 = vld [vmem:[%s702 + $0x40] sm:$0xff]
        %v712 = vld [vmem:[%s702 + $0x48] sm:$0xff]
        %v713 = vld [vmem:[%s702 + $0x50] sm:$0xff]
        %v714 = vld [vmem:[%s702 + $0x58] sm:$0xff]
        %v715 = vrot.slane %v700, 7
        %v716 = vrot.slane %v701, 7
        %v717 = vsel %vm532, %v715, %v716
        %v718 = vsel %vm532, %v716, %v715
        %v719 = vsel %vm537, %v718, 0.0
        %v720 = vsel %vm538, %v717, 0.0
        %v721 = vld [vmem:[%s3] sm:$0xff]
        %v722 = vld [vmem:[%s3 + $0x8] sm:$0xff]
        %v723 = vld [vmem:[%s3 + $0x10] sm:$0xff]
        %v724 = vld [vmem:[%s3 + $0x18] sm:$0xff]
        %v725 = vld [vmem:[%s3 + $0x20] sm:$0xff]
        %v726 = vld [vmem:[%s3 + $0x28] sm:$0xff]
        %v727 = vld [vmem:[%s3 + $0x30] sm:$0xff]
        %v728 = vld [vmem:[%s3 + $0x38] sm:$0xff]
        %v729 = vld [vmem:[%s3 + $0x40] sm:$0xff]
        %v730 = vld [vmem:[%s3 + $0x48] sm:$0xff]
        %v731 = vld [vmem:[%s3 + $0x50] sm:$0xff]
        %v732 = vld [vmem:[%s3 + $0x58] sm:$0xff]
        %vm733 = vcmask 785408
        %v735 = vsel %vm733, %v719, 0
        %v738 = vsel %vm733, %v720, 0
        %740 = vmatpush.msra.mxu0 0.0
        %741 = vmatpush.msra.mxu0 0.0
        %742 = vmatpush.msra.mxu0 0.0
        %743 = vmatpush.msra.mxu0 0.0
        %744 = vmatpush.msra.mxu0 %v732
        %745 = vmatpush.msra.mxu0 %v731
        %746 = vmatpush.msra.mxu0 %v730
        %747 = vmatpush.msra.mxu0 %v729
        %748 = vmatpush.msra.mxu0 %v728
        %749 = vmatpush.msra.mxu0 %v727
        %750 = vmatpush.msra.mxu0 %v726
        %751 = vmatpush.msra.mxu0 %v725
        %752 = vmatpush.msra.mxu0 %v724
        %753 = vmatpush.msra.mxu0 %v723
        %754 = vmatpush.msra.mxu0 %v722
        %755 = vmatpush.msra.mxu0 %v721
        %756 = vmatmul.f32.gmra.mxu0 %v735
        %v757 = vpop.f32.mrf.mxu0
        %v758 = vadd.f32 0.0, %v757
        %759 = vmatmul.f32.gmra.mxu0 %v738
        %v760 = vpop.f32.mrf.mxu0
        %v761 = vadd.f32 0.0, %v760
        %762 = vdwg.mxu0
        %v764 = vsel %vm733, %v700, 0
        %v767 = vsel %vm733, %v701, 0
        %769 = vmatpush.msra.mxu0 0.0
        %770 = vmatpush.msra.mxu0 0.0
        %771 = vmatpush.msra.mxu0 0.0
        %772 = vmatpush.msra.mxu0 0.0
        %773 = vmatpush.msra.mxu0 %v714
        %774 = vmatpush.msra.mxu0 %v713
        %775 = vmatpush.msra.mxu0 %v712
        %776 = vmatpush.msra.mxu0 %v711
        %777 = vmatpush.msra.mxu0 %v710
        %778 = vmatpush.msra.mxu0 %v709
        %779 = vmatpush.msra.mxu0 %v708
        %780 = vmatpush.msra.mxu0 %v707
        %781 = vmatpush.msra.mxu0 %v706
        %782 = vmatpush.msra.mxu0 %v705
        %783 = vmatpush.msra.mxu0 %v704
        %784 = vmatpush.msra.mxu0 %v703
        %785 = vmatmul.f32.gmra.mxu0 %v764
        %v786 = vpop.f32.mrf.mxu0
        %v787 = vadd.f32 %v758, %v786
        %788 = vmatmul.f32.gmra.mxu0 %v767
        %v789 = vpop.f32.mrf.mxu0
        %v790 = vadd.f32 %v761, %v789
        %791 = vdwg.mxu0
        %v792 = vrot.slane %v700, 1
        %v793 = vrot.slane %v701, 1
        %v794 = vsel %vm605, %v792, %v793
        %v795 = vsel %vm605, %v793, %v792
        %v796 = vsel %vm610, %v794, 0.0
        %v797 = vsel %vm611, %v795, 0.0
        %s798 = scalar_lea.vmem %s3, 192
        %v799 = vld [vmem:[%s798] sm:$0xff]
        %v800 = vld [vmem:[%s798 + $0x8] sm:$0xff]
        %v801 = vld [vmem:[%s798 + $0x10] sm:$0xff]
        %v802 = vld [vmem:[%s798 + $0x18] sm:$0xff]
        %v803 = vld [vmem:[%s798 + $0x20] sm:$0xff]
        %v804 = vld [vmem:[%s798 + $0x28] sm:$0xff]
        %v805 = vld [vmem:[%s798 + $0x30] sm:$0xff]
        %v806 = vld [vmem:[%s798 + $0x38] sm:$0xff]
        %v807 = vld [vmem:[%s798 + $0x40] sm:$0xff]
        %v808 = vld [vmem:[%s798 + $0x48] sm:$0xff]
        %v809 = vld [vmem:[%s798 + $0x50] sm:$0xff]
        %v810 = vld [vmem:[%s798 + $0x58] sm:$0xff]
        %v812 = vsel %vm733, %v796, 0
        %v815 = vsel %vm733, %v797, 0
        %817 = vmatpush.msra.mxu0 0.0
        %818 = vmatpush.msra.mxu0 0.0
        %819 = vmatpush.msra.mxu0 0.0
        %820 = vmatpush.msra.mxu0 0.0
        %821 = vmatpush.msra.mxu0 %v810
        %822 = vmatpush.msra.mxu0 %v809
        %823 = vmatpush.msra.mxu0 %v808
        %824 = vmatpush.msra.mxu0 %v807
        %825 = vmatpush.msra.mxu0 %v806
        %826 = vmatpush.msra.mxu0 %v805
        %827 = vmatpush.msra.mxu0 %v804
        %828 = vmatpush.msra.mxu0 %v803
        %829 = vmatpush.msra.mxu0 %v802
        %830 = vmatpush.msra.mxu0 %v801
        %831 = vmatpush.msra.mxu0 %v800
        %832 = vmatpush.msra.mxu0 %v799
        %833 = vmatmul.f32.gmra.mxu0 %v812
        %v834 = vpop.f32.mrf.mxu0
        %v835 = vadd.f32 0.0, %v834
        %836 = vmatmul.f32.gmra.mxu0 %v815
        %v837 = vpop.f32.mrf.mxu0
        %v838 = vadd.f32 0.0, %v837
        %839 = vdwg.mxu0
        %v840 = vadd.f32 %v787, %v835
        %v841 = vadd.f32 %v790, %v838
        %v842 = vld [vmem:[#allocation5] sm:$0x1]
        %v844 = vperm.slane %v842, 0
        %v846 = vadd.f32 %v840, %v844
        %v847 = vadd.f32 %v841, %v844
        %v848 = vxor.u32 %v846, 2147483648
        %v849 = vxor.u32 %v847, 2147483648
        %v850 = vmul.f32 %v848, 1.442695
        %v851 = vpow.pop %v850
        %v852 = vmul.f32 %v849, 1.442695
        %v853 = vpow.pop %v852
        %v854 = vadd.f32 %v851, 1.0
        %v855 = vadd.f32 %v853, 1.0
        %v856 = vrcp.pop %v854
        %v857 = vmul.f32 %v854, %v856
        %v858 = vsub.f32 1.0, %v857
        %v859 = vmul.f32 %v856, %v858
        %v860 = vadd.f32 %v856, %v859
        %vm861 = vweird.f32 %v854
        %vm862 = vweird.f32 %v856
        %vm863 = vmor %vm861, %vm862
        %v864 = vsel %vm863, %v856, %v860
        %v865 = vand.u32 2147483647, %v854
        %vm866 = vcmp.eq.f32.partialorder %v865, 8.507059e+37
        %v867 = vand.u32 %v854, 2147483648
        %v868 = vor.u32 1.1754944e-38, %v867
        %v869 = vsel %vm866, %v868, %v864
        %v870 = vmul.f32 1.0, %v869
        %v871 = vrcp.pop %v855
        %v872 = vmul.f32 %v855, %v871
        %v873 = vsub.f32 1.0, %v872
        %v874 = vmul.f32 %v871, %v873
        %v875 = vadd.f32 %v871, %v874
        %vm876 = vweird.f32 %v855
        %vm877 = vweird.f32 %v871
        %vm878 = vmor %vm876, %vm877
        %v879 = vsel %vm878, %v871, %v875
        %v880 = vand.u32 2147483647, %v855
        %vm881 = vcmp.eq.f32.partialorder %v880, 8.507059e+37
        %v882 = vand.u32 %v855, 2147483648
        %v883 = vor.u32 1.1754944e-38, %v882
        %v884 = vsel %vm881, %v883, %v879
        %v885 = vmul.f32 1.0, %v884
        %v886 = vmul.f32 %v846, %v870
        %v887 = vmul.f32 %v847, %v885
        %v888 = vld [vmem:[%s5] sm:$0xff]
        %v889 = vld [vmem:[%s5 + $0x8] sm:$0xff]
        %v890 = vld [vmem:[%s5 + $0x10] sm:$0xff]
        %v891 = vld [vmem:[%s5 + $0x18] sm:$0xff]
        %v892 = vld [vmem:[%s5 + $0x20] sm:$0xff]
        %v893 = vld [vmem:[%s5 + $0x28] sm:$0xff]
        %v894 = vld [vmem:[%s5 + $0x30] sm:$0xff]
        %v895 = vld [vmem:[%s5 + $0x38] sm:$0xff]
        %v896 = vld [vmem:[%s5 + $0x40] sm:$0xff]
        %v897 = vld [vmem:[%s5 + $0x48] sm:$0xff]
        %v898 = vld [vmem:[%s5 + $0x50] sm:$0xff]
        %v899 = vld [vmem:[%s5 + $0x58] sm:$0xff]
        %v900 = vld [vmem:[#allocation7] sm:$0x1]
        %v902 = vperm.slane %v900, 0
        %v905 = vsel %vm733, %v886, 0
        %v908 = vsel %vm733, %v887, 0
        %910 = vmatpush.msra.mxu0 0.0
        %911 = vmatpush.msra.mxu0 0.0
        %912 = vmatpush.msra.mxu0 0.0
        %913 = vmatpush.msra.mxu0 0.0
        %914 = vmatpush.msra.mxu0 %v899
        %915 = vmatpush.msra.mxu0 %v898
        %916 = vmatpush.msra.mxu0 %v897
        %917 = vmatpush.msra.mxu0 %v896
        %918 = vmatpush.msra.mxu0 %v895
        %919 = vmatpush.msra.mxu0 %v894
        %920 = vmatpush.msra.mxu0 %v893
        %921 = vmatpush.msra.mxu0 %v892
        %922 = vmatpush.msra.mxu0 %v891
        %923 = vmatpush.msra.mxu0 %v890
        %924 = vmatpush.msra.mxu0 %v889
        %925 = vmatpush.msra.mxu0 %v888
        %926 = vmatmul.f32.gmra.mxu0 %v905
        %v927 = vpop.f32.mrf.mxu0
        %v928 = vadd.f32 %v902, %v927
        %929 = vmatmul.f32.gmra.mxu0 %v908
        %v930 = vpop.f32.mrf.mxu0
        %v931 = vadd.f32 %v902, %v930
        %932 = vdwg.mxu0
        %v933 = vxor.u32 %v928, 2147483648
        %v934 = vxor.u32 %v931, 2147483648
        %v935 = vmul.f32 %v933, 1.442695
        %v936 = vpow.pop %v935
        %v937 = vmul.f32 %v934, 1.442695
        %v938 = vpow.pop %v937
        %v939 = vadd.f32 %v936, 1.0
        %v940 = vadd.f32 %v938, 1.0
        %v941 = vrcp.pop %v939
        %v942 = vmul.f32 %v939, %v941
        %v943 = vsub.f32 1.0, %v942
        %v944 = vmul.f32 %v941, %v943
        %v945 = vadd.f32 %v941, %v944
        %vm946 = vweird.f32 %v939
        %vm947 = vweird.f32 %v941
        %vm948 = vmor %vm946, %vm947
        %v949 = vsel %vm948, %v941, %v945
        %v950 = vand.u32 2147483647, %v939
        %vm951 = vcmp.eq.f32.partialorder %v950, 8.507059e+37
        %v952 = vand.u32 %v939, 2147483648
        %v953 = vor.u32 1.1754944e-38, %v952
        %v954 = vsel %vm951, %v953, %v949
        %v955 = vmul.f32 1.0, %v954
        %v956 = vrcp.pop %v940
        %v957 = vmul.f32 %v940, %v956
        %v958 = vsub.f32 1.0, %v957
        %v959 = vmul.f32 %v956, %v958
        %v960 = vadd.f32 %v956, %v959
        %vm961 = vweird.f32 %v940
        %vm962 = vweird.f32 %v956
        %vm963 = vmor %vm961, %vm962
        %v964 = vsel %vm963, %v956, %v960
        %v965 = vand.u32 2147483647, %v940
        %vm966 = vcmp.eq.f32.partialorder %v965, 8.507059e+37
        %v967 = vand.u32 %v940, 2147483648
        %v968 = vor.u32 1.1754944e-38, %v967
        %v969 = vsel %vm966, %v968, %v964
        %v970 = vmul.f32 1.0, %v969
        %v971 = vmul.f32 %v928, %v955
        %v972 = vmul.f32 %v931, %v970
        %v973 = vld [vmem:[%s7] sm:$0xff]
        %v974 = vld [vmem:[%s7 + $0x8] sm:$0xff]
        %v975 = vld [vmem:[%s7 + $0x10] sm:$0xff]
        %v976 = vld [vmem:[%s7 + $0x18] sm:$0xff]
        %v977 = vld [vmem:[%s7 + $0x20] sm:$0xff]
        %v978 = vld [vmem:[%s7 + $0x28] sm:$0xff]
        %v979 = vld [vmem:[%s7 + $0x30] sm:$0xff]
        %v980 = vld [vmem:[%s7 + $0x38] sm:$0xff]
        %v981 = vld [vmem:[%s7 + $0x40] sm:$0xff]
        %v982 = vld [vmem:[%s7 + $0x48] sm:$0xff]
        %v983 = vld [vmem:[%s7 + $0x50] sm:$0xff]
        %v984 = vld [vmem:[%s7 + $0x58] sm:$0xff]
        %v985 = vld [vmem:[%s7 + $0x60] sm:$0xff]
        %v986 = vld [vmem:[%s7 + $0x68] sm:$0xff]
        %v987 = vld [vmem:[%s7 + $0x70] sm:$0xff]
        %v988 = vld [vmem:[%s7 + $0x78] sm:$0xff]
        %v989 = vld [vmem:[%s8] sm:$0x1]
        %v991 = vperm.slane %v989, 0
        %993 = vmatpush.msra.mxu0 %v988
        %994 = vmatpush.msra.mxu0 %v987
        %995 = vmatpush.msra.mxu0 %v986
        %996 = vmatpush.msra.mxu0 %v985
        %997 = vmatpush.msra.mxu0 %v984
        %998 = vmatpush.msra.mxu0 %v983
        %999 = vmatpush.msra.mxu0 %v982
        %1000 = vmatpush.msra.mxu0 %v981
        %1001 = vmatpush.msra.mxu0 %v980
        %1002 = vmatpush.msra.mxu0 %v979
        %1003 = vmatpush.msra.mxu0 %v978
        %1004 = vmatpush.msra.mxu0 %v977
        %1005 = vmatpush.msra.mxu0 %v976
        %1006 = vmatpush.msra.mxu0 %v975
        %1007 = vmatpush.msra.mxu0 %v974
        %1008 = vmatpush.msra.mxu0 %v973
        %1009 = vmatmul.f32.gmra.mxu0 %v500
        %v1010 = vpop.f32.mrf.mxu0
        %v1011 = vadd.f32 %v991, %v1010
        %1012 = vmatmul.f32.gmra.mxu0 %v501
        %v1013 = vpop.f32.mrf.mxu0
        %v1014 = vadd.f32 %v991, %v1013
        %1015 = vdwg.mxu0
        %v1016 = vxor.u32 %v1011, 2147483648
        %v1017 = vxor.u32 %v1014, 2147483648
        %v1018 = vmul.f32 %v1016, 1.442695
        %v1019 = vpow.pop %v1018
        %v1020 = vmul.f32 %v1017, 1.442695
        %v1021 = vpow.pop %v1020
        %v1022 = vadd.f32 %v1019, 1.0
        %v1023 = vadd.f32 %v1021, 1.0
        %v1024 = vrcp.pop %v1022
        %v1025 = vmul.f32 %v1022, %v1024
        %v1026 = vsub.f32 1.0, %v1025
        %v1027 = vmul.f32 %v1024, %v1026
        %v1028 = vadd.f32 %v1024, %v1027
        %vm1029 = vweird.f32 %v1022
        %vm1030 = vweird.f32 %v1024
        %vm1031 = vmor %vm1029, %vm1030
        %v1032 = vsel %vm1031, %v1024, %v1028
        %v1033 = vand.u32 2147483647, %v1022
        %vm1034 = vcmp.eq.f32.partialorder %v1033, 8.507059e+37
        %v1035 = vand.u32 %v1022, 2147483648
        %v1036 = vor.u32 1.1754944e-38, %v1035
        %v1037 = vsel %vm1034, %v1036, %v1032
        %v1038 = vmul.f32 1.0, %v1037
        %v1039 = vrcp.pop %v1023
        %v1040 = vmul.f32 %v1023, %v1039
        %v1041 = vsub.f32 1.0, %v1040
        %v1042 = vmul.f32 %v1039, %v1041
        %v1043 = vadd.f32 %v1039, %v1042
        %vm1044 = vweird.f32 %v1023
        %vm1045 = vweird.f32 %v1039
        %vm1046 = vmor %vm1044, %vm1045
        %v1047 = vsel %vm1046, %v1039, %v1043
        %v1048 = vand.u32 2147483647, %v1023
        %vm1049 = vcmp.eq.f32.partialorder %v1048, 8.507059e+37
        %v1050 = vand.u32 %v1023, 2147483648
        %v1051 = vor.u32 1.1754944e-38, %v1050
        %v1052 = vsel %vm1049, %v1051, %v1047
        %v1053 = vmul.f32 1.0, %v1052
        %v1054 = vmul.f32 %v1011, %v1038
        %v1055 = vmul.f32 %v1014, %v1053
        %v1056 = vld [vmem:[%s9] sm:$0xff]
        %v1057 = vld [vmem:[%s9 + $0x8] sm:$0xff]
        %v1058 = vld [vmem:[%s9 + $0x10] sm:$0xff]
        %v1059 = vld [vmem:[%s9 + $0x18] sm:$0xff]
        %v1060 = vld [vmem:[%s9 + $0x20] sm:$0xff]
        %v1061 = vld [vmem:[%s9 + $0x28] sm:$0xff]
        %v1062 = vld [vmem:[%s9 + $0x30] sm:$0xff]
        %v1063 = vld [vmem:[%s9 + $0x38] sm:$0xff]
        %v1064 = vld [vmem:[%s9 + $0x40] sm:$0xff]
        %v1065 = vld [vmem:[%s9 + $0x48] sm:$0xff]
        %v1066 = vld [vmem:[%s9 + $0x50] sm:$0xff]
        %v1067 = vld [vmem:[%s9 + $0x58] sm:$0xff]
        %v1068 = vld [vmem:[%s9 + $0x60] sm:$0xff]
        %v1069 = vld [vmem:[%s9 + $0x68] sm:$0xff]
        %v1070 = vld [vmem:[%s9 + $0x70] sm:$0xff]
        %v1071 = vld [vmem:[%s9 + $0x78] sm:$0xff]
        %v1072 = vld [vmem:[%s10] sm:$0x1]
        %v1074 = vperm.slane %v1072, 0
        %1076 = vmatpush.msra.mxu0 %v1071
        %1077 = vmatpush.msra.mxu0 %v1070
        %1078 = vmatpush.msra.mxu0 %v1069
        %1079 = vmatpush.msra.mxu0 %v1068
        %1080 = vmatpush.msra.mxu0 %v1067
        %1081 = vmatpush.msra.mxu0 %v1066
        %1082 = vmatpush.msra.mxu0 %v1065
        %1083 = vmatpush.msra.mxu0 %v1064
        %1084 = vmatpush.msra.mxu0 %v1063
        %1085 = vmatpush.msra.mxu0 %v1062
        %1086 = vmatpush.msra.mxu0 %v1061
        %1087 = vmatpush.msra.mxu0 %v1060
        %1088 = vmatpush.msra.mxu0 %v1059
        %1089 = vmatpush.msra.mxu0 %v1058
        %1090 = vmatpush.msra.mxu0 %v1057
        %1091 = vmatpush.msra.mxu0 %v1056
        %1092 = vmatmul.f32.gmra.mxu0 %v1054
        %v1093 = vpop.f32.mrf.mxu0
        %v1094 = vadd.f32 %v1074, %v1093
        %1095 = vmatmul.f32.gmra.mxu0 %v1055
        %v1096 = vpop.f32.mrf.mxu0
        %v1097 = vadd.f32 %v1074, %v1096
        %1098 = vdwg.mxu0
        %v1099 = vxor.u32 %v1094, 2147483648
        %v1100 = vxor.u32 %v1097, 2147483648
        %v1101 = vmul.f32 %v1099, 1.442695
        %v1102 = vpow.pop %v1101
        %v1103 = vmul.f32 %v1100, 1.442695
        %v1104 = vpow.pop %v1103
        %v1105 = vadd.f32 %v1102, 1.0
        %v1106 = vadd.f32 %v1104, 1.0
        %v1107 = vrcp.pop %v1105
        %v1108 = vmul.f32 %v1105, %v1107
        %v1109 = vsub.f32 1.0, %v1108
        %v1110 = vmul.f32 %v1107, %v1109
        %v1111 = vadd.f32 %v1107, %v1110
        %vm1112 = vweird.f32 %v1105
        %vm1113 = vweird.f32 %v1107
        %vm1114 = vmor %vm1112, %vm1113
        %v1115 = vsel %vm1114, %v1107, %v1111
        %v1116 = vand.u32 2147483647, %v1105
        %vm1117 = vcmp.eq.f32.partialorder %v1116, 8.507059e+37
        %v1118 = vand.u32 %v1105, 2147483648
        %v1119 = vor.u32 1.1754944e-38, %v1118
        %v1120 = vsel %vm1117, %v1119, %v1115
        %v1121 = vmul.f32 1.0, %v1120
        %v1122 = vrcp.pop %v1106
        %v1123 = vmul.f32 %v1106, %v1122
        %v1124 = vsub.f32 1.0, %v1123
        %v1125 = vmul.f32 %v1122, %v1124
        %v1126 = vadd.f32 %v1122, %v1125
        %vm1127 = vweird.f32 %v1106
        %vm1128 = vweird.f32 %v1122
        %vm1129 = vmor %vm1127, %vm1128
        %v1130 = vsel %vm1129, %v1122, %v1126
        %v1131 = vand.u32 2147483647, %v1106
        %vm1132 = vcmp.eq.f32.partialorder %v1131, 8.507059e+37
        %v1133 = vand.u32 %v1106, 2147483648
        %v1134 = vor.u32 1.1754944e-38, %v1133
        %v1135 = vsel %vm1132, %v1134, %v1130
        %v1136 = vmul.f32 1.0, %v1135
        %v1137 = vld [vmem:[#allocation8] sm:$0xff]
        %v1138 = vld [vmem:[#allocation8 + $0x8] sm:$0x1]
        %v1139 = vrot.slane %v971, 7
        %v1140 = vrot.slane %v972, 7
        %v1141 = vsel %vm532, %v1139, %v1140
        %v1142 = vsel %vm532, %v1140, %v1139
        %v1143 = vsel %vm537, %v1142, 0.0
        %v1144 = vsel %vm538, %v1141, 0.0
        %v1145 = vrot.slane %v971, 1
        %v1146 = vrot.slane %v972, 1
        %v1147 = vsel %vm605, %v1145, %v1146
        %v1148 = vsel %vm605, %v1146, %v1145
        %v1149 = vsel %vm610, %v1147, 0.0
        %v1150 = vsel %vm611, %v1148, 0.0
        %1151 = vrot.lane.b32.xlu0 %v1143, 8
        %v1152 = vpop.permute.xlu0 %1151
        %1153 = vrot.lane.b32.xlu0 %v1144, 8
        %v1154 = vpop.permute.xlu0 %1153
        %v1155 = vsel %vm511, 1, 0
        %vm1156 = vcmp.eq.s32.totalorder %v1155, 1
        %v1157 = vsel %vm1156, %v1152, 0.0
        %v1158 = vsel %vm1156, %v1154, 0.0
        %v1159 = vperm.slane %v1137, 0
        %v1160 = vmul.f32 %v1157, %v1159
        %v1161 = vmul.f32 %v1158, %v1159
        %v1162 = vadd.f32 %v1160, 0.0
        %v1163 = vadd.f32 %v1161, 0.0
        %v1164 = vperm.slane %v1137, 1
        %v1165 = vmul.f32 %v1143, %v1164
        %v1166 = vmul.f32 %v1144, %v1164
        %v1167 = vadd.f32 %v1162, %v1165
        %v1168 = vadd.f32 %v1163, %v1166
        %1169 = vrot.lane.b32.xlu0 %v1143, 120
        %v1170 = vpop.permute.xlu0 %1169
        %1171 = vrot.lane.b32.xlu0 %v1144, 120
        %v1172 = vpop.permute.xlu0 %1171
        %v1173 = vsel %vm512, 1, 0
        %vm1174 = vcmp.eq.s32.totalorder %v1173, 1
        %v1175 = vsel %vm1174, %v1170, 0.0
        %v1176 = vsel %vm1174, %v1172, 0.0
        %v1177 = vperm.slane %v1137, 2
        %v1178 = vmul.f32 %v1175, %v1177
        %v1179 = vmul.f32 %v1176, %v1177
        %v1180 = vadd.f32 %v1167, %v1178
        %v1181 = vadd.f32 %v1168, %v1179
        %1182 = vrot.lane.b32.xlu0 %v971, 8
        %v1183 = vpop.permute.xlu0 %1182
        %1184 = vrot.lane.b32.xlu0 %v972, 8
        %v1185 = vpop.permute.xlu0 %1184
        %v1186 = vsel %vm1156, %v1183, 0.0
        %v1187 = vsel %vm1156, %v1185, 0.0
        %v1188 = vperm.slane %v1137, 3
        %v1189 = vmul.f32 %v1186, %v1188
        %v1190 = vmul.f32 %v1187, %v1188
        %v1191 = vadd.f32 %v1180, %v1189
        %v1192 = vadd.f32 %v1181, %v1190
        %v1193 = vperm.slane %v1137, 4
        %v1194 = vmul.f32 %v971, %v1193
        %v1195 = vmul.f32 %v972, %v1193
        %v1196 = vadd.f32 %v1191, %v1194
        %v1197 = vadd.f32 %v1192, %v1195
        %1198 = vrot.lane.b32.xlu0 %v971, 120
        %v1199 = vpop.permute.xlu0 %1198
        %1200 = vrot.lane.b32.xlu0 %v972, 120
        %v1201 = vpop.permute.xlu0 %1200
        %v1202 = vsel %vm1174, %v1199, 0.0
        %v1203 = vsel %vm1174, %v1201, 0.0
        %v1204 = vperm.slane %v1137, 5
        %v1205 = vmul.f32 %v1202, %v1204
        %v1206 = vmul.f32 %v1203, %v1204
        %v1207 = vadd.f32 %v1196, %v1205
        %v1208 = vadd.f32 %v1197, %v1206
        %1209 = vrot.lane.b32.xlu0 %v1149, 8
        %v1210 = vpop.permute.xlu0 %1209
        %1211 = vrot.lane.b32.xlu0 %v1150, 8
        %v1212 = vpop.permute.xlu0 %1211
        %v1213 = vsel %vm1156, %v1210, 0.0
        %v1214 = vsel %vm1156, %v1212, 0.0
        %v1215 = vperm.slane %v1137, 6
        %v1216 = vmul.f32 %v1213, %v1215
        %v1217 = vmul.f32 %v1214, %v1215
        %v1218 = vadd.f32 %v1207, %v1216
        %v1219 = vadd.f32 %v1208, %v1217
        %v1220 = vperm.slane %v1137, 7
        %v1221 = vmul.f32 %v1149, %v1220
        %v1222 = vmul.f32 %v1150, %v1220
        %v1223 = vadd.f32 %v1218, %v1221
        %v1224 = vadd.f32 %v1219, %v1222
        %1225 = vrot.lane.b32.xlu0 %v1149, 120
        %v1226 = vpop.permute.xlu0 %1225
        %1227 = vrot.lane.b32.xlu0 %v1150, 120
        %v1228 = vpop.permute.xlu0 %1227
        %v1229 = vsel %vm1174, %v1226, 0.0
        %v1230 = vsel %vm1174, %v1228, 0.0
        %v1231 = vperm.slane %v1138, 0
        %v1232 = vmul.f32 %v1229, %v1231
        %v1233 = vmul.f32 %v1230, %v1231
        %v1234 = vadd.f32 %v1223, %v1232
        %v1235 = vadd.f32 %v1224, %v1233
        %v1236 = vadd.f32 %v1234, %v1235
        %v1237 = vrot.slane %v1236, 4
        %v1238 = vadd.f32 %v1236, %v1237
        %v1239 = vrot.slane %v1238, 2
        %v1240 = vadd.f32 %v1238, %v1239
        %v1241 = vrot.slane %v1240, 1
        %v1242 = vadd.f32 %v1240, %v1241
        %1243 = vrot.lane.b32.xlu0 %v1242, 64
        %v1244 = vpop.permute.xlu0 %1243
        %v1245 = vadd.f32 %v1242, %v1244
        %1246 = vrot.lane.b32.xlu0 %v1245, 32
        %v1247 = vpop.permute.xlu0 %1246
        %v1248 = vadd.f32 %v1245, %v1247
        %1249 = vrot.lane.b32.xlu0 %v1248, 16
        %v1250 = vpop.permute.xlu0 %1249
        %v1251 = vadd.f32 %v1248, %v1250
        %1252 = vrot.lane.b32.xlu0 %v1251, 8
        %v1253 = vpop.permute.xlu0 %1252
        %v1254 = vadd.f32 %v1251, %v1253
        %v1255 = vmul.f32 %v1254, 0.00390625
        %v1256 = vld [vmem:[%s12] sm:$0x1]
        %v1257 = vadd.f32 %v1255, %v1256
        %v1258 = vxor.u32 %v1257, 2147483648
        %v1259 = vmul.f32 %v1258, 1.442695
        %v1260 = vpow.pop %v1259
        %v1261 = vadd.f32 %v1260, 1.0
        %v1262 = vrcp.pop %v1261
        %v1263 = vmul.f32 %v1261, %v1262
        %v1264 = vsub.f32 1.0, %v1263
        %v1265 = vmul.f32 %v1262, %v1264
        %v1266 = vadd.f32 %v1262, %v1265
        %vm1267 = vweird.f32 %v1261
        %vm1268 = vweird.f32 %v1262
        %vm1269 = vmor %vm1267, %vm1268
        %v1270 = vsel %vm1269, %v1262, %v1266
        %v1271 = vand.u32 2147483647, %v1261
        %vm1272 = vcmp.eq.f32.partialorder %v1271, 8.507059e+37
        %v1273 = vand.u32 %v1261, 2147483648
        %v1274 = vor.u32 1.1754944e-38, %v1273
        %v1275 = vsel %vm1272, %v1274, %v1270
        %v1276 = vmul.f32 1.0, %v1275
        %v1277 = vmul.f32 %v1121, %v971
        %v1278 = vmul.f32 %v1136, %v972
        %v1279 = vperm.slane %v1276, 0
        %v1280 = vmul.f32 %v1279, %v1054
        %v1281 = vmul.f32 %v1279, %v1055
        %v1282 = vadd.f32 %v1277, %v1280
        %v1283 = vadd.f32 %v1278, %v1281
        %1284 = vst [vmem:[%s494] sm:$0xff] %v1282
        %1285 = vst [vmem:[%s494 + $0x8] sm:$0xff] %v1283
        %s1286 = sand.u32 %s316, 1
        %s1287 = scalar_lea.sflag [#allocation4], %s1286
        %s1288 = sand.u32 %s316, 1
        %s1289 = smul.addr %s1288, 16
        %s1290 = scalar_lea.vmem [#allocation10], %s1289
        // Predicated region
        $region89: #{tpu_custom_call.1} parent=71 // pred_check
          %p1291 = pneg %p326
        $region90: #{tpu_custom_call.1} parent=71 // pred_check_branch
          %1293 = sbr.rel (%p1291) target = $region92
        $region91: #{tpu_custom_call.1} parent=71 // pred_region
          %1295 = vsyncadd %s1287, 0
          %s1296 = smul.addr %s30, 2
          %s1297 = smul.addr %s1296, 8
          %s1298 = scalar_lea.hbm %s13, %s1297
          %s1299 = sshll.u32 %s1290, 4
          %s1300 = int_to_ptr.vmem [resolvable:$true] %s1299
          %s1301 = sshll.u32 %s1298, 4
          %s1302 = int_to_ptr.hbm [resolvable:$true] %s1301
          %1307 = dma.vmem_to_hbm [thread:$0]  %s1300, 256, %s1302, %s1287, 128, 128, 8
        $region92: #{tpu_custom_call.1} parent=71 // pred_fallthru
          _
      $region72: #{tpu_custom_call.1} parent=5 // pred_fallthru
        _
      %p1308 = scmp.le.s32.totalorder 2, %s25
      // Predicated region
      $region93: #{tpu_custom_call.1} parent=5 // pred_check
        %p1309 = pneg %p1308
      $region94: #{tpu_custom_call.1} parent=5 // pred_check_branch
        %1311 = sbr.rel (%p1309) target = $region96
      $region95: #{tpu_custom_call.1} parent=5 // pred_region
        %s1312 = ssub.s32 %s25, 2
        // Predicated region
        $region97: #{tpu_custom_call.1} parent=95 // pred_check
          %p1313 = pneg %p332
        $region98: #{tpu_custom_call.1} parent=95 // pred_check_branch
          %1315 = sbr.rel (%p1313) target = $region100
        $region99: #{tpu_custom_call.1} parent=95 // pred_region
          %s1316 = sand.u32 %s317, 1
          %s1317 = scalar_lea.sflag [#allocation4], %s1316
          %s1318 = sand.u32 %s317, 1
          %s1319 = smul.addr %s1318, 16
          %s1320 = scalar_lea.vmem [#allocation10], %s1319
          %1322 = dma.done %s1317, 256
        $region100: #{tpu_custom_call.1} parent=95 // pred_fallthru
          _
      $region96: #{tpu_custom_call.1} parent=5 // pred_fallthru
        _
    $region6: #{tpu_custom_call.1} parent=1 // loop_footer
      %s29 = sadd.s32 1, %s25
    $region7: #{tpu_custom_call.1} parent=1 // loop_footer_branch
      %24 = sbr.rel target = $region3
    $region8: #{tpu_custom_call.1} parent=1 // loop_exit
      _
    %1323 = vsyncpa [#allocation3], 1
    %s1324 = scalar_lea.sflag [#allocation3], 1
    %1325 = vsyncpa %s1324, 1
    %1326 = vsyncpa [#allocation6], 1
    %1327 = vsyncpa [#allocation9], 1
    %1328 = vsyncpa [#allocation4], 1
    %s1329 = scalar_lea.sflag [#allocation4], 1
    %1330 = vsyncpa %s1329, 1

</llo_original>
